<compile_context>
chip_gen: v7x
topology: tpu7x:2x2x1
jax: 0.10.0
libtpu: 0.0.40
codegen_flags: <defaults>
</compile_context>

<pallas_src>
import functools

import jax
import jax.numpy as jnp
from jax.experimental import pallas as pl
from jax.experimental.pallas import tpu as pltpu


# ---------------------------------------------------------------------------
# crop_bbox_batch: bilinear crop of each normalized box to (HH, WW).
# TODO(synk): grid_sample-style bilinear gather is data-dependent gather; kept as JAX glue.
# ---------------------------------------------------------------------------
def crop_bbox_batch(imgs, boxes, obj_to_img, HH, WW=None):
    if WW is None:
        WW = HH
    _, _, H, W = imgs.shape
    feats = imgs[obj_to_img]                                   # (O, C, H, W)
    x0, y0, x1, y1 = boxes[:, 0], boxes[:, 1], boxes[:, 2], boxes[:, 3]
    tx = jnp.linspace(0.0, 1.0, WW)
    ty = jnp.linspace(0.0, 1.0, HH)
    xs = (x0[:, None] + (x1 - x0)[:, None] * tx[None, :]) * (W - 1)   # (O, WW)
    ys = (y0[:, None] + (y1 - y0)[:, None] * ty[None, :]) * (H - 1)   # (O, HH)
    x0i = jnp.clip(jnp.floor(xs), 0, W - 2).astype(jnp.int32)
    y0i = jnp.clip(jnp.floor(ys), 0, H - 2).astype(jnp.int32)
    wx = jnp.clip(xs - x0i, 0.0, 1.0)
    wy = jnp.clip(ys - y0i, 0.0, 1.0)

    def crop_one(img, yi, xi, wyv, wxv):
        rows0 = img[:, yi, :]            # (C, HH, W)
        rows1 = img[:, yi + 1, :]
        a = rows0[:, :, xi]              # (C, HH, WW)
        b = rows0[:, :, xi + 1]
        c = rows1[:, :, xi]
        d = rows1[:, :, xi + 1]
        wyg = wyv[None, :, None]
        wxg = wxv[None, None, :]
        return (a * (1 - wyg) * (1 - wxg) + b * (1 - wyg) * wxg
                + c * wyg * (1 - wxg) + d * wyg * wxg)

    return jax.vmap(crop_one)(feats, y0i, x0i, wy, wx)          # (O, C, HH, WW)


# ---------------------------------------------------------------------------
# Wrapper-side weight transform: fold KW taps + W 'same' padding + stride of a
# 3x3 conv into per-KH band matrices of shape (KH, W_in*Cin, W_out*Cout).
# ---------------------------------------------------------------------------
def _band_matrices(w, w_in, w_out, stride, pad):
    kh, kw, cin, cout = w.shape
    m = jnp.zeros((kh, w_in * cin, w_out * cout), jnp.float32)
    for j in range(w_out):
        for k in range(kw):
            wi = stride * j + k - pad
            if 0 <= wi < w_in:
                m = m.at[:, wi * cin:(wi + 1) * cin,
                         j * cout:(j + 1) * cout].set(w[:, k])
    return m


# ---------------------------------------------------------------------------
# The single fused kernel (one grid step = one object crop).
# ---------------------------------------------------------------------------
def _fused_discriminator_kernel(y_ref,                  # scalar prefetch (SMEM): (O,) int32 labels
                                src_ref,                # (5, Ho1/2, W*Cin) phase-packed padded rows
                                m1_ref, b1_ref,         # conv1 band matrices / tiled bias
                                m2_ref, b2_ref,         # conv2 band matrices / tiled bias
                                wpf_ref, bfc_ref,       # GAP+FC folded weight / bias
                                wh_ref, bh_ref,         # [real | obj | 0-pad] head weight / bias
                                raw1_ref, act2_ref, scores_ref,
                                *, num_objects):
    o = pl.program_id(0)
    src = src_ref[...]                                  # (5, Ho1/2, W*Cin) bf16

    # ---- conv1 (3x3, stride 2, pad 1): each H-tap is one band matmul over (W, Cin).
    # Even output rows 2t read padded rows 4t+{0,1,2}; odd rows 2t+1 read 4t+{2,3,4}.
    def tap1(s, kh):
        return jnp.dot(src[s], m1_ref[kh], preferred_element_type=jnp.float32)

    e1 = tap1(0, 0) + tap1(1, 1) + tap1(2, 2) + b1_ref[...]     # (Ho1/2, Wo1*C1)
    o1 = tap1(2, 0) + tap1(3, 1) + tap1(4, 2) + b1_ref[...]     # (Ho1/2, Wo1*C1)

    # discr_layers[0] = pre-ReLU conv1 output, packed [even | odd] -> 128-lane dense store.
    raw1_ref[...] = jnp.concatenate([e1, o1], axis=-1)

    e1a = jnp.maximum(e1, 0.0).astype(jnp.bfloat16)
    o1a = jnp.maximum(o1, 0.0).astype(jnp.bfloat16)

    # ---- conv2 (3x3, stride 2, pad 1): out row i' reads act1 rows
    # {2i'-1, 2i', 2i'+1} = {odd[i'-1] (zero H-pad at i'=0), even[i'], odd[i']}.
    t0 = jnp.dot(o1a, m2_ref[0], preferred_element_type=jnp.float32)
    n = t0.shape[0]
    ii = jax.lax.broadcasted_iota(jnp.int32, (n, n), 0)
    jj = jax.lax.broadcasted_iota(jnp.int32, (n, n), 1)
    shift_down = (ii == jj + 1).astype(jnp.float32)             # row i' <- row i'-1 (0 at i'=0)
    acc2 = jnp.dot(shift_down, t0, preferred_element_type=jnp.float32)
    acc2 = acc2 + jnp.dot(e1a, m2_ref[1], preferred_element_type=jnp.float32)
    acc2 = acc2 + jnp.dot(o1a, m2_ref[2], preferred_element_type=jnp.float32)
    act2 = jnp.maximum(acc2 + b2_ref[...], 0.0)                 # (Ho2, Wo2*C2)
    act2_ref[...] = act2                                        # discr_layers[1]

    # ---- GlobalAvgPool + Linear(D, 1024): W-mean + FC folded into wpf (wrapper).
    s = jnp.sum(act2, axis=0, keepdims=True)                    # (1, Wo2*C2)
    vecs = jnp.dot(s.astype(jnp.bfloat16), wpf_ref[...],
                   preferred_element_type=jnp.float32) + bfc_ref[...]   # (1, 1024)

    # ---- real + obj classifiers: one lane-dense (1, 128) matmul.
    scores = jnp.dot(vecs.astype(jnp.bfloat16), wh_ref[...],
                     preferred_element_type=jnp.float32) + bh_ref[...]  # (1, 128)

    # ---- softmax cross-entropy for this object over lanes [1, 1+num_objects)
    #      (masked, lane-dense; mean over objects taken in the wrapper).
    lane = jax.lax.broadcasted_iota(jnp.int32, scores.shape, 1)          # (1, 128)
    is_obj = jnp.logical_and(lane >= 1, lane < 1 + num_objects)
    neg = jnp.float32(-1e30)
    obj_masked = jnp.where(is_obj, scores, neg)
    m = jnp.max(obj_masked, axis=-1, keepdims=True)                      # (1, 1)
    ex = jnp.where(is_obj, jnp.exp(obj_masked - m), 0.0)
    lse = m + jnp.log(jnp.sum(ex, axis=-1, keepdims=True))               # (1, 1)
    label_lane = 1 + y_ref[o]                                            # SMEM scalar read
    picked = jnp.sum(jnp.where(lane == label_lane, scores, 0.0),
                     axis=-1, keepdims=True)                             # (1, 1)
    nll = lse - picked                                                   # (1, 1)

    # pack [real | obj | nll | 0...] into one dense (8, 128) output tile.
    out_row = jnp.where(lane == 1 + num_objects, nll, scores)
    scores_ref[...] = jnp.broadcast_to(out_row, scores_ref.shape)


# ---------------------------------------------------------------------------
# AcDiscriminator forward: one pallas_call, grid over objects.
# ---------------------------------------------------------------------------
def ac_discriminator_forward(x, y, params):
    """x: (O, C, H, W) crops (float32); y: (O,) int labels."""
    if x.ndim == 3:
        x = x[:, None]
    n_obj, cin, h, w = x.shape
    c1 = params['w_conv1'].shape[-1]
    c2 = params['w_conv2'].shape[-1]
    hidden = params['w_fc'].shape[-1]
    num_obj = params['w_obj'].shape[-1]
    ho1, wo1 = h // 2, w // 2                 # 3x3 / stride 2 / 'same' pad
    ho2, wo2 = ho1 // 2, wo1 // 2

    # --- wrapper-side prep (pure XLA, ~1x the input bytes; no 9x im2col blowup) ---
    # phase-packed padded rows: src[o, k, t, :] = xpadH[o, 4t + k, :]
    xh = jnp.transpose(x, (0, 2, 3, 1)).reshape(n_obj, h, w * cin)
    xpad = jnp.pad(xh, ((0, 0), (1, 1), (0, 0)))                      # H 'same' pad
    tap_rows = 4 * jnp.arange(ho1 // 2)[None, :] + jnp.arange(5)[:, None]   # (5, ho1//2)
    src = xpad[:, tap_rows, :].astype(jnp.bfloat16)                   # (O, 5, ho1//2, w*cin)

    m1 = _band_matrices(params['w_conv1'], w, wo1, 2, 1).astype(jnp.bfloat16)
    m2 = _band_matrices(params['w_conv2'], wo1, wo2, 2, 1).astype(jnp.bfloat16)
    b1t = jnp.tile(params['b_conv1'], (1, wo1))                       # (1, wo1*c1)
    b2t = jnp.tile(params['b_conv2'], (1, wo2))                       # (1, wo2*c2)
    wpf = (jnp.tile(params['w_fc'], (wo2, 1)) / float(ho2 * wo2)).astype(jnp.bfloat16)
    bfc = params['b_fc']
    wh = jnp.concatenate([params['w_real'], params['w_obj']], axis=1)
    wh = jnp.pad(wh, ((0, 0), (0, 128 - wh.shape[1]))).astype(jnp.bfloat16)   # lane-dense
    bh = jnp.concatenate([params['b_real'], params['b_obj']], axis=1)
    bh = jnp.pad(bh, ((0, 0), (0, 128 - bh.shape[1])))
    y32 = y.astype(jnp.int32)

    kernel = functools.partial(_fused_discriminator_kernel, num_objects=num_obj)
    grid_spec = pltpu.PrefetchScalarGridSpec(
        num_scalar_prefetch=1,
        grid=(n_obj,),
        in_specs=[
            pl.BlockSpec((None, 5, ho1 // 2, w * cin), lambda o, _: (o, 0, 0, 0)),
            pl.BlockSpec((3, w * cin, wo1 * c1), lambda o, _: (0, 0, 0)),
            pl.BlockSpec((1, wo1 * c1), lambda o, _: (0, 0)),
            pl.BlockSpec((3, wo1 * c1, wo2 * c2), lambda o, _: (0, 0, 0)),
            pl.BlockSpec((1, wo2 * c2), lambda o, _: (0, 0)),
            pl.BlockSpec((wo2 * c2, hidden), lambda o, _: (0, 0)),
            pl.BlockSpec((1, hidden), lambda o, _: (0, 0)),
            pl.BlockSpec((hidden, 128), lambda o, _: (0, 0)),
            pl.BlockSpec((1, 128), lambda o, _: (0, 0)),
        ],
        out_specs=[
            pl.BlockSpec((None, ho1 // 2, 2 * wo1 * c1), lambda o, _: (o, 0, 0)),
            pl.BlockSpec((None, ho2, wo2 * c2), lambda o, _: (o, 0, 0)),
            pl.BlockSpec((None, 8, 128), lambda o, _: (o, 0, 0)),
        ],
    )
    raw1_eo, act2_flat, head = pl.pallas_call(
        kernel,
        grid_spec=grid_spec,
        out_shape=(
            jax.ShapeDtypeStruct((n_obj, ho1 // 2, 2 * wo1 * c1), jnp.float32),
            jax.ShapeDtypeStruct((n_obj, ho2, wo2 * c2), jnp.float32),
            jax.ShapeDtypeStruct((n_obj, 8, 128), jnp.float32),
        ),
        compiler_params=pltpu.CompilerParams(
            dimension_semantics=("parallel",)),      # objects shard across TCs on v7x
    )(y32, src, m1, b1t, m2, b2t, wpf, bfc, wh, bh)

    # --- unpack outputs (cheap XLA slices/reshapes) ---
    even = raw1_eo[:, :, :wo1 * c1]
    odd = raw1_eo[:, :, wo1 * c1:]
    raw1 = jnp.stack([even, odd], axis=2).reshape(n_obj, ho1, wo1, c1)     # NHWC
    act2 = act2_flat.reshape(n_obj, ho2, wo2, c2)                          # NHWC
    real_scores = head[:, 0, 0:1]                                          # (O, 1)
    ac_loss = jnp.mean(head[:, 0, 1 + num_obj])                            # mean CE
    discr_layers = [raw1, act2]
    return real_scores, ac_loss, discr_layers


def ac_crop_discriminator_forward(imgs, objs, boxes, obj_to_img, params,
                                  object_size=16):
    crops = crop_bbox_batch(imgs, boxes, obj_to_img, object_size)
    return ac_discriminator_forward(crops, objs, params)


# ---------------------------------------------------------------------------
# Deterministic synthetic parameters (shapes implied by __init__).
# ---------------------------------------------------------------------------
def init_params(key, cin, conv_channels, hidden, num_objects, ksize=3):
    keys = jax.random.split(key, 10)
    c1, c2 = conv_channels
    d = c2                                     # build_cnn returns D = last C
    s = 0.1
    return {
        'w_conv1': s * jax.random.normal(keys[0], (ksize, ksize, cin, c1), jnp.float32),
        'b_conv1': s * jax.random.normal(keys[1], (1, c1), jnp.float32),
        'w_conv2': s * jax.random.normal(keys[2], (ksize, ksize, c1, c2), jnp.float32),
        'b_conv2': s * jax.random.normal(keys[3], (1, c2), jnp.float32),
        'w_fc':    s * jax.random.normal(keys[4], (d, hidden), jnp.float32),
        'b_fc':    s * jax.random.normal(keys[5], (1, hidden), jnp.float32),
        'w_real':  s * jax.random.normal(keys[6], (hidden, 1), jnp.float32),
        'b_real':  s * jax.random.normal(keys[7], (1, 1), jnp.float32),
        'w_obj':   s * jax.random.normal(keys[8], (hidden, num_objects), jnp.float32),
        'b_obj':   s * jax.random.normal(keys[9], (1, num_objects), jnp.float32),
    }


# Pure-JAX f32 reference of the discriminator forward (correctness check only).
def forward_reference(crops, y, params):
    xh = jnp.transpose(crops, (0, 2, 3, 1))

    def conv(inp, w, b, stride, pad):
        out = jax.lax.conv_general_dilated(
            inp, w, (stride, stride), ((pad, pad), (pad, pad)),
            dimension_numbers=('NHWC', 'HWIO', 'NHWC'))
        return out + b.reshape(1, 1, 1, -1)

    raw1 = conv(xh, params['w_conv1'], params['b_conv1'], 2, 1)
    act1 = jnp.maximum(raw1, 0.0)
    act2 = jnp.maximum(conv(act1, params['w_conv2'], params['b_conv2'], 2, 1), 0.0)
    pooled = act2.reshape(act2.shape[0], -1, act2.shape[-1]).mean(axis=1)
    vecs = pooled @ params['w_fc'] + params['b_fc']
    real = vecs @ params['w_real'] + params['b_real']
    obj = vecs @ params['w_obj'] + params['b_obj']
    logp = jax.nn.log_softmax(obj, axis=-1)
    loss = -jnp.mean(logp[jnp.arange(obj.shape[0]), y])
    return real, loss, [raw1, act2]


if __name__ == "__main__":
    vocab = {'object_idx_to_name':
             ['__image__', 'person', 'tree', 'car', 'dog', 'sky', 'building']}
    num_objects = len(vocab['object_idx_to_name'])

    key = jax.random.PRNGKey(0)
    kimg, kobj, kp = jax.random.split(key, 3)

    N, C, H, W = 2, 3, 32, 32
    OBJ = 3
    object_size = 16

    imgs = jax.random.normal(kimg, (N, C, H, W), jnp.float32)
    objs = jax.random.randint(kobj, (OBJ,), 0, num_objects, dtype=jnp.int32)
    boxes = jnp.array([[0.10, 0.15, 0.70, 0.80],
                       [0.00, 0.00, 0.50, 0.50],
                       [0.25, 0.20, 0.95, 0.90]], jnp.float32)
    obj_to_img = jnp.array([0, 1, 1], jnp.int32)

    params = init_params(kp, cin=C, conv_channels=(8, 16),
                         hidden=1024, num_objects=num_objects)

    fwd = jax.jit(functools.partial(ac_crop_discriminator_forward,
                                    object_size=object_size))
    real_scores, ac_loss, discr_layers = fwd(imgs, objs, boxes, obj_to_img, params)
    jax.block_until_ready((real_scores, ac_loss, discr_layers))

    # reference on the same crops; kernel uses bf16 MXU operands with f32 accumulation,
    # hence the 2e-2 tolerance.
    crops = crop_bbox_batch(imgs, boxes, obj_to_img, object_size)
    r_ref, l_ref, dl_ref = forward_reference(crops, objs, params)

    assert real_scores.shape == (OBJ, 1)
    assert jnp.allclose(real_scores, r_ref, atol=2e-2, rtol=2e-2)
    assert jnp.allclose(ac_loss, l_ref, atol=2e-2, rtol=2e-2)
    for a, b in zip(discr_layers, dl_ref):
        assert a.shape == b.shape
        assert jnp.allclose(a, b, atol=2e-2, rtol=2e-2)

    print("KERNEL_OK")
</pallas_src>

<mosaic_0001>
module attributes {stable_mosaic.version = 11 : i64} {
  func.func @_fused_discriminator_kernel(%arg0: i32, %arg1: memref<3xi32, #tpu.memory_space<smem>>, %arg2: memref<1x5x4x48xbf16, #tpu.memory_space<vmem>>, %arg3: memref<3x48x64xbf16, #tpu.memory_space<vmem>>, %arg4: memref<1x64xf32, #tpu.memory_space<vmem>>, %arg5: memref<3x64x64xbf16, #tpu.memory_space<vmem>>, %arg6: memref<1x64xf32, #tpu.memory_space<vmem>>, %arg7: memref<64x1024xbf16, #tpu.memory_space<vmem>>, %arg8: memref<1x1024xf32, #tpu.memory_space<vmem>>, %arg9: memref<1024x128xbf16, #tpu.memory_space<vmem>>, %arg10: memref<1x128xf32, #tpu.memory_space<vmem>>, %arg11: memref<1x4x128xf32, #tpu.memory_space<vmem>>, %arg12: memref<1x4x64xf32, #tpu.memory_space<vmem>>, %arg13: memref<1x8x128xf32, #tpu.memory_space<vmem>>) attributes {dimension_semantics = [#tpu.dimension_semantics<parallel>], iteration_bounds = array<i64: 3>, scalar_prefetch = 1 : i64, scratch_operands = 0 : i64, tpu.core_type = #tpu.core_type<tc>, window_params = [{transform_indices = @transform_0, window_bounds = array<i64: 1, 5, 4, 48>}, {pipeline_mode = #tpu.pipeline_mode<synchronous>, transform_indices = @transform_1, window_bounds = array<i64: 3, 48, 64>}, {pipeline_mode = #tpu.pipeline_mode<synchronous>, transform_indices = @transform_2, window_bounds = array<i64: 1, 64>}, {pipeline_mode = #tpu.pipeline_mode<synchronous>, transform_indices = @transform_3, window_bounds = array<i64: 3, 64, 64>}, {pipeline_mode = #tpu.pipeline_mode<synchronous>, transform_indices = @transform_4, window_bounds = array<i64: 1, 64>}, {pipeline_mode = #tpu.pipeline_mode<synchronous>, transform_indices = @transform_5, window_bounds = array<i64: 64, 1024>}, {pipeline_mode = #tpu.pipeline_mode<synchronous>, transform_indices = @transform_6, window_bounds = array<i64: 1, 1024>}, {pipeline_mode = #tpu.pipeline_mode<synchronous>, transform_indices = @transform_7, window_bounds = array<i64: 1024, 128>}, {pipeline_mode = #tpu.pipeline_mode<synchronous>, transform_indices = @transform_8, window_bounds = array<i64: 1, 128>}, {transform_indices = @transform_9, window_bounds = array<i64: 1, 4, 128>}, {transform_indices = @transform_10, window_bounds = array<i64: 1, 4, 64>}, {transform_indices = @transform_11, window_bounds = array<i64: 1, 8, 128>}]} {
    %c0 = arith.constant 0 : index
    %c0_0 = arith.constant 0 : index
    %c0_1 = arith.constant 0 : index
    %c0_2 = arith.constant 0 : index
    %0 = vector.load %arg2[%c0, %c0_0, %c0_1, %c0_2] : memref<1x5x4x48xbf16, #tpu.memory_space<vmem>>, vector<1x5x4x48xbf16>
    %1 = vector.shape_cast %0 : vector<1x5x4x48xbf16> to vector<5x4x48xbf16>
    %2 = vector.extract_strided_slice %1 {offsets = [0, 0, 0], sizes = [1, 4, 48], strides = [1, 1, 1]} : vector<5x4x48xbf16> to vector<1x4x48xbf16>
    %3 = vector.shape_cast %2 : vector<1x4x48xbf16> to vector<4x48xbf16>
    %c0_3 = arith.constant 0 : index
    %c0_4 = arith.constant 0 : index
    %c0_5 = arith.constant 0 : index
    %4 = vector.load %arg3[%c0_3, %c0_4, %c0_5] : memref<3x48x64xbf16, #tpu.memory_space<vmem>>, vector<1x48x64xbf16>
    %5 = vector.shape_cast %4 : vector<1x48x64xbf16> to vector<48x64xbf16>
    %cst = arith.constant dense<0.000000e+00> : vector<4x64xf32>
    %6 = tpu.matmul %3, %5, %cst {dimension_numbers = #tpu.dot_dimension_numbers<[1], [0], [0], [1], [0, 0, 1, 1], [], []>} : vector<4x48xbf16>, vector<48x64xbf16>, vector<4x64xf32> -> vector<4x64xf32>
    %7 = vector.extract_strided_slice %1 {offsets = [1, 0, 0], sizes = [1, 4, 48], strides = [1, 1, 1]} : vector<5x4x48xbf16> to vector<1x4x48xbf16>
    %8 = vector.shape_cast %7 : vector<1x4x48xbf16> to vector<4x48xbf16>
    %c1 = arith.constant 1 : index
    %c0_6 = arith.constant 0 : index
    %c0_7 = arith.constant 0 : index
    %9 = vector.load %arg3[%c1, %c0_6, %c0_7] : memref<3x48x64xbf16, #tpu.memory_space<vmem>>, vector<1x48x64xbf16>
    %10 = vector.shape_cast %9 : vector<1x48x64xbf16> to vector<48x64xbf16>
    %cst_8 = arith.constant dense<0.000000e+00> : vector<4x64xf32>
    %11 = tpu.matmul %8, %10, %cst_8 {dimension_numbers = #tpu.dot_dimension_numbers<[1], [0], [0], [1], [0, 0, 1, 1], [], []>} : vector<4x48xbf16>, vector<48x64xbf16>, vector<4x64xf32> -> vector<4x64xf32>
    %12 = arith.addf %6, %11 : vector<4x64xf32>
    %13 = vector.extract_strided_slice %1 {offsets = [2, 0, 0], sizes = [1, 4, 48], strides = [1, 1, 1]} : vector<5x4x48xbf16> to vector<1x4x48xbf16>
    %14 = vector.shape_cast %13 : vector<1x4x48xbf16> to vector<4x48xbf16>
    %c2 = arith.constant 2 : index
    %c0_9 = arith.constant 0 : index
    %c0_10 = arith.constant 0 : index
    %15 = vector.load %arg3[%c2, %c0_9, %c0_10] : memref<3x48x64xbf16, #tpu.memory_space<vmem>>, vector<1x48x64xbf16>
    %16 = vector.shape_cast %15 : vector<1x48x64xbf16> to vector<48x64xbf16>
    %cst_11 = arith.constant dense<0.000000e+00> : vector<4x64xf32>
    %17 = tpu.matmul %14, %16, %cst_11 {dimension_numbers = #tpu.dot_dimension_numbers<[1], [0], [0], [1], [0, 0, 1, 1], [], []>} : vector<4x48xbf16>, vector<48x64xbf16>, vector<4x64xf32> -> vector<4x64xf32>
    %18 = arith.addf %12, %17 : vector<4x64xf32>
    %c0_12 = arith.constant 0 : index
    %c0_13 = arith.constant 0 : index
    %19 = vector.load %arg4[%c0_12, %c0_13] : memref<1x64xf32, #tpu.memory_space<vmem>>, vector<1x64xf32>
    %20 = vector.broadcast %19 : vector<1x64xf32> to vector<4x64xf32>
    %21 = arith.addf %18, %20 : vector<4x64xf32>
    %22 = vector.extract_strided_slice %1 {offsets = [2, 0, 0], sizes = [1, 4, 48], strides = [1, 1, 1]} : vector<5x4x48xbf16> to vector<1x4x48xbf16>
    %23 = vector.shape_cast %22 : vector<1x4x48xbf16> to vector<4x48xbf16>
    %c0_14 = arith.constant 0 : index
    %c0_15 = arith.constant 0 : index
    %c0_16 = arith.constant 0 : index
    %24 = vector.load %arg3[%c0_14, %c0_15, %c0_16] : memref<3x48x64xbf16, #tpu.memory_space<vmem>>, vector<1x48x64xbf16>
    %25 = vector.shape_cast %24 : vector<1x48x64xbf16> to vector<48x64xbf16>
    %cst_17 = arith.constant dense<0.000000e+00> : vector<4x64xf32>
    %26 = tpu.matmul %23, %25, %cst_17 {dimension_numbers = #tpu.dot_dimension_numbers<[1], [0], [0], [1], [0, 0, 1, 1], [], []>} : vector<4x48xbf16>, vector<48x64xbf16>, vector<4x64xf32> -> vector<4x64xf32>
    %27 = vector.extract_strided_slice %1 {offsets = [3, 0, 0], sizes = [1, 4, 48], strides = [1, 1, 1]} : vector<5x4x48xbf16> to vector<1x4x48xbf16>
    %28 = vector.shape_cast %27 : vector<1x4x48xbf16> to vector<4x48xbf16>
    %c1_18 = arith.constant 1 : index
    %c0_19 = arith.constant 0 : index
    %c0_20 = arith.constant 0 : index
    %29 = vector.load %arg3[%c1_18, %c0_19, %c0_20] : memref<3x48x64xbf16, #tpu.memory_space<vmem>>, vector<1x48x64xbf16>
    %30 = vector.shape_cast %29 : vector<1x48x64xbf16> to vector<48x64xbf16>
    %cst_21 = arith.constant dense<0.000000e+00> : vector<4x64xf32>
    %31 = tpu.matmul %28, %30, %cst_21 {dimension_numbers = #tpu.dot_dimension_numbers<[1], [0], [0], [1], [0, 0, 1, 1], [], []>} : vector<4x48xbf16>, vector<48x64xbf16>, vector<4x64xf32> -> vector<4x64xf32>
    %32 = arith.addf %26, %31 : vector<4x64xf32>
    %33 = vector.extract_strided_slice %1 {offsets = [4, 0, 0], sizes = [1, 4, 48], strides = [1, 1, 1]} : vector<5x4x48xbf16> to vector<1x4x48xbf16>
    %34 = vector.shape_cast %33 : vector<1x4x48xbf16> to vector<4x48xbf16>
    %c2_22 = arith.constant 2 : index
    %c0_23 = arith.constant 0 : index
    %c0_24 = arith.constant 0 : index
    %35 = vector.load %arg3[%c2_22, %c0_23, %c0_24] : memref<3x48x64xbf16, #tpu.memory_space<vmem>>, vector<1x48x64xbf16>
    %36 = vector.shape_cast %35 : vector<1x48x64xbf16> to vector<48x64xbf16>
    %cst_25 = arith.constant dense<0.000000e+00> : vector<4x64xf32>
    %37 = tpu.matmul %34, %36, %cst_25 {dimension_numbers = #tpu.dot_dimension_numbers<[1], [0], [0], [1], [0, 0, 1, 1], [], []>} : vector<4x48xbf16>, vector<48x64xbf16>, vector<4x64xf32> -> vector<4x64xf32>
    %38 = arith.addf %32, %37 : vector<4x64xf32>
    %c0_26 = arith.constant 0 : index
    %c0_27 = arith.constant 0 : index
    %39 = vector.load %arg4[%c0_26, %c0_27] : memref<1x64xf32, #tpu.memory_space<vmem>>, vector<1x64xf32>
    %40 = vector.broadcast %39 : vector<1x64xf32> to vector<4x64xf32>
    %41 = arith.addf %38, %40 : vector<4x64xf32>
    %42 = tpu.concatenate %21, %41 in 1 : vector<4x64xf32>, vector<4x64xf32> -> vector<4x128xf32>
    %c0_28 = arith.constant 0 : index
    %c0_29 = arith.constant 0 : index
    %c0_30 = arith.constant 0 : index
    %43 = vector.load %arg11[%c0_28, %c0_29, %c0_30] : memref<1x4x128xf32, #tpu.memory_space<vmem>>, vector<1x4x128xf32>
    %44 = vector.shape_cast %43 : vector<1x4x128xf32> to vector<4x128xf32>
    %45 = vector.shape_cast %42 : vector<4x128xf32> to vector<1x4x128xf32>
    tpu.vector_store %arg11[%c0_28, %c0_29, %c0_30], %45 {strides = array<i32>} : memref<1x4x128xf32, #tpu.memory_space<vmem>>, vector<1x4x128xf32>,
    %cst_31 = arith.constant 0.000000e+00 : f32
    %46 = vector.broadcast %cst_31 : f32 to vector<4x64xf32>
    %47 = arith.maximumf %21, %46 : vector<4x64xf32>
    %48 = arith.truncf %47 : vector<4x64xf32> to vector<4x64xbf16>
    %cst_32 = arith.constant 0.000000e+00 : f32
    %49 = vector.broadcast %cst_32 : f32 to vector<4x64xf32>
    %50 = arith.maximumf %41, %49 : vector<4x64xf32>
    %51 = arith.truncf %50 : vector<4x64xf32> to vector<4x64xbf16>
    %c0_33 = arith.constant 0 : index
    %c0_34 = arith.constant 0 : index
    %c0_35 = arith.constant 0 : index
    %52 = vector.load %arg5[%c0_33, %c0_34, %c0_35] : memref<3x64x64xbf16, #tpu.memory_space<vmem>>, vector<1x64x64xbf16>
    %53 = vector.shape_cast %52 : vector<1x64x64xbf16> to vector<64x64xbf16>
    %cst_36 = arith.constant dense<0.000000e+00> : vector<4x64xf32>
    %54 = tpu.matmul %51, %53, %cst_36 {dimension_numbers = #tpu.dot_dimension_numbers<[1], [0], [0], [1], [0, 0, 1, 1], [], []>} : vector<4x64xbf16>, vector<64x64xbf16>, vector<4x64xf32> -> vector<4x64xf32>
    %55 = tpu.iota {dimensions = array<i32: 0>} : vector<4x4xi32>
    %56 = tpu.iota {dimensions = array<i32: 1>} : vector<4x4xi32>
    %c1_i32 = arith.constant 1 : i32
    %57 = vector.broadcast %c1_i32 : i32 to vector<4x4xi32>
    %58 = arith.addi %56, %57 : vector<4x4xi32>
    %59 = arith.cmpi eq, %55, %58 : vector<4x4xi32>
    %60 = arith.extui %59 : vector<4x4xi1> to vector<4x4xi32>
    %61 = arith.sitofp %60 : vector<4x4xi32> to vector<4x4xf32>
    %cst_37 = arith.constant dense<0.000000e+00> : vector<4x64xf32>
    %62 = tpu.matmul %61, %54, %cst_37 {dimension_numbers = #tpu.dot_dimension_numbers<[1], [0], [0], [1], [0, 0, 1, 1], [], []>} : vector<4x4xf32>, vector<4x64xf32>, vector<4x64xf32> -> vector<4x64xf32>
    %c1_38 = arith.constant 1 : index
    %c0_39 = arith.constant 0 : index
    %c0_40 = arith.constant 0 : index
    %63 = vector.load %arg5[%c1_38, %c0_39, %c0_40] : memref<3x64x64xbf16, #tpu.memory_space<vmem>>, vector<1x64x64xbf16>
    %64 = vector.shape_cast %63 : vector<1x64x64xbf16> to vector<64x64xbf16>
    %cst_41 = arith.constant dense<0.000000e+00> : vector<4x64xf32>
    %65 = tpu.matmul %48, %64, %cst_41 {dimension_numbers = #tpu.dot_dimension_numbers<[1], [0], [0], [1], [0, 0, 1, 1], [], []>} : vector<4x64xbf16>, vector<64x64xbf16>, vector<4x64xf32> -> vector<4x64xf32>
    %66 = arith.addf %62, %65 : vector<4x64xf32>
    %c2_42 = arith.constant 2 : index
    %c0_43 = arith.constant 0 : index
    %c0_44 = arith.constant 0 : index
    %67 = vector.load %arg5[%c2_42, %c0_43, %c0_44] : memref<3x64x64xbf16, #tpu.memory_space<vmem>>, vector<1x64x64xbf16>
    %68 = vector.shape_cast %67 : vector<1x64x64xbf16> to vector<64x64xbf16>
    %cst_45 = arith.constant dense<0.000000e+00> : vector<4x64xf32>
    %69 = tpu.matmul %51, %68, %cst_45 {dimension_numbers = #tpu.dot_dimension_numbers<[1], [0], [0], [1], [0, 0, 1, 1], [], []>} : vector<4x64xbf16>, vector<64x64xbf16>, vector<4x64xf32> -> vector<4x64xf32>
    %70 = arith.addf %66, %69 : vector<4x64xf32>
    %c0_46 = arith.constant 0 : index
    %c0_47 = arith.constant 0 : index
    %71 = vector.load %arg6[%c0_46, %c0_47] : memref<1x64xf32, #tpu.memory_space<vmem>>, vector<1x64xf32>
    %72 = vector.broadcast %71 : vector<1x64xf32> to vector<4x64xf32>
    %73 = arith.addf %70, %72 : vector<4x64xf32>
    %cst_48 = arith.constant 0.000000e+00 : f32
    %74 = vector.broadcast %cst_48 : f32 to vector<4x64xf32>
    %75 = arith.maximumf %73, %74 : vector<4x64xf32>
    %c0_49 = arith.constant 0 : index
    %c0_50 = arith.constant 0 : index
    %c0_51 = arith.constant 0 : index
    %76 = vector.load %arg12[%c0_49, %c0_50, %c0_51] : memref<1x4x64xf32, #tpu.memory_space<vmem>>, vector<1x4x64xf32>
    %77 = vector.shape_cast %76 : vector<1x4x64xf32> to vector<4x64xf32>
    %78 = vector.shape_cast %75 : vector<4x64xf32> to vector<1x4x64xf32>
    tpu.vector_store %arg12[%c0_49, %c0_50, %c0_51], %78 {strides = array<i32>} : memref<1x4x64xf32, #tpu.memory_space<vmem>>, vector<1x4x64xf32>,
    %cst_52 = arith.constant dense<0.000000e+00> : vector<64xf32>
    %79 = vector.multi_reduction <add>, %75, %cst_52 [0] : vector<4x64xf32> to vector<64xf32>
    %80 = vector.shape_cast %79 : vector<64xf32> to vector<1x64xf32>
    %81 = arith.truncf %80 : vector<1x64xf32> to vector<1x64xbf16>
    %c0_53 = arith.constant 0 : index
    %c0_54 = arith.constant 0 : index
    %82 = vector.load %arg7[%c0_53, %c0_54] : memref<64x1024xbf16, #tpu.memory_space<vmem>>, vector<64x1024xbf16>
    %cst_55 = arith.constant dense<0.000000e+00> : vector<1x1024xf32>
    %83 = tpu.matmul %81, %82, %cst_55 {dimension_numbers = #tpu.dot_dimension_numbers<[1], [0], [0], [1], [0, 0, 1, 1], [], []>} : vector<1x64xbf16>, vector<64x1024xbf16>, vector<1x1024xf32> -> vector<1x1024xf32>
    %c0_56 = arith.constant 0 : index
    %c0_57 = arith.constant 0 : index
    %84 = vector.load %arg8[%c0_56, %c0_57] : memref<1x1024xf32, #tpu.memory_space<vmem>>, vector<1x1024xf32>
    %85 = arith.addf %83, %84 : vector<1x1024xf32>
    %86 = arith.truncf %85 : vector<1x1024xf32> to vector<1x1024xbf16>
    %c0_58 = arith.constant 0 : index
    %c0_59 = arith.constant 0 : index
    %87 = vector.load %arg9[%c0_58, %c0_59] : memref<1024x128xbf16, #tpu.memory_space<vmem>>, vector<1024x128xbf16>
    %cst_60 = arith.constant dense<0.000000e+00> : vector<1x128xf32>
    %88 = tpu.matmul %86, %87, %cst_60 {dimension_numbers = #tpu.dot_dimension_numbers<[1], [0], [0], [1], [0, 0, 1, 1], [], []>} : vector<1x1024xbf16>, vector<1024x128xbf16>, vector<1x128xf32> -> vector<1x128xf32>
    %c0_61 = arith.constant 0 : index
    %c0_62 = arith.constant 0 : index
    %89 = vector.load %arg10[%c0_61, %c0_62] : memref<1x128xf32, #tpu.memory_space<vmem>>, vector<1x128xf32>
    %90 = arith.addf %88, %89 : vector<1x128xf32>
    %91 = tpu.iota {dimensions = array<i32: 1>} : vector<1x128xi32>
    %c1_i32_63 = arith.constant 1 : i32
    %92 = vector.broadcast %c1_i32_63 : i32 to vector<1x128xi32>
    %93 = arith.cmpi sge, %91, %92 : vector<1x128xi32>
    %c8_i32 = arith.constant 8 : i32
    %94 = vector.broadcast %c8_i32 : i32 to vector<1x128xi32>
    %95 = arith.cmpi slt, %91, %94 : vector<1x128xi32>
    %96 = arith.andi %93, %95 : vector<1x128xi1>
    %cst_64 = arith.constant -1.000000e+30 : f32
    %97 = vector.broadcast %cst_64 : f32 to vector<1x128xf32>
    %98 = arith.select %96, %90, %97 : vector<1x128xi1>, vector<1x128xf32>
    %cst_65 = arith.constant dense<0xFF800000> : vector<1xf32>
    %99 = vector.multi_reduction <maximumf>, %98, %cst_65 [1] : vector<1x128xf32> to vector<1xf32>
    %100 = vector.shape_cast %99 : vector<1xf32> to vector<1x1xf32>
    %101 = vector.broadcast %100 : vector<1x1xf32> to vector<1x128xf32>
    %102 = arith.subf %98, %101 : vector<1x128xf32>
    %103 = math.exp %102 : vector<1x128xf32>
    %cst_66 = arith.constant 0.000000e+00 : f32
    %104 = vector.broadcast %cst_66 : f32 to vector<1x128xf32>
    %105 = arith.select %96, %103, %104 : vector<1x128xi1>, vector<1x128xf32>
    %cst_67 = arith.constant dense<0.000000e+00> : vector<1xf32>
    %106 = vector.multi_reduction <add>, %105, %cst_67 [1] : vector<1x128xf32> to vector<1xf32>
    %107 = vector.shape_cast %106 : vector<1xf32> to vector<1x1xf32>
    %108 = math.log %107 : vector<1x1xf32>
    %109 = arith.addf %100, %108 : vector<1x1xf32>
    %110 = arith.index_cast %arg0 : i32 to index
    %111 = memref.load %arg1[%110] : memref<3xi32, #tpu.memory_space<smem>>
    %c1_i32_68 = arith.constant 1 : i32
    %112 = arith.addi %c1_i32_68, %111 : i32
    %113 = vector.broadcast %112 : i32 to vector<1x128xi32>
    %114 = arith.cmpi eq, %91, %113 : vector<1x128xi32>
    %cst_69 = arith.constant 0.000000e+00 : f32
    %115 = vector.broadcast %cst_69 : f32 to vector<1x128xf32>
    %116 = arith.select %114, %90, %115 : vector<1x128xi1>, vector<1x128xf32>
    %cst_70 = arith.constant dense<0.000000e+00> : vector<1xf32>
    %117 = vector.multi_reduction <add>, %116, %cst_70 [1] : vector<1x128xf32> to vector<1xf32>
    %118 = vector.shape_cast %117 : vector<1xf32> to vector<1x1xf32>
    %119 = arith.subf %109, %118 : vector<1x1xf32>
    %c8_i32_71 = arith.constant 8 : i32
    %120 = vector.broadcast %c8_i32_71 : i32 to vector<1x128xi32>
    %121 = arith.cmpi eq, %91, %120 : vector<1x128xi32>
    %122 = vector.shape_cast %119 : vector<1x1xf32> to vector<1x1xf32>
    %123 = vector.broadcast %122 : vector<1x1xf32> to vector<1x128xf32>
    %124 = arith.select %121, %123, %90 : vector<1x128xi1>, vector<1x128xf32>
    %125 = vector.shape_cast %124 : vector<1x128xf32> to vector<1x128xf32>
    %126 = vector.broadcast %125 : vector<1x128xf32> to vector<8x128xf32>
    %c0_72 = arith.constant 0 : index
    %c0_73 = arith.constant 0 : index
    %c0_74 = arith.constant 0 : index
    %127 = vector.load %arg13[%c0_72, %c0_73, %c0_74] : memref<1x8x128xf32, #tpu.memory_space<vmem>>, vector<1x8x128xf32>
    %128 = vector.shape_cast %127 : vector<1x8x128xf32> to vector<8x128xf32>
    %129 = vector.shape_cast %126 : vector<8x128xf32> to vector<1x8x128xf32>
    tpu.vector_store %arg13[%c0_72, %c0_73, %c0_74], %129 {strides = array<i32>} : memref<1x8x128xf32, #tpu.memory_space<vmem>>, vector<1x8x128xf32>,
    return
  }
  func.func @transform_0(%arg0: i32, %arg1: memref<3xi32, #tpu.memory_space<smem>>) -> (i32, i32, i32, i32) {
    %c0_i32 = arith.constant 0 : i32
    %c0_i32_0 = arith.constant 0 : i32
    %c0_i32_1 = arith.constant 0 : i32
    %c0_i32_2 = arith.constant 0 : i32
    return %arg0, %c0_i32, %c0_i32_0, %c0_i32_1 : i32, i32, i32, i32
  }
  func.func @transform_1(%arg0: i32, %arg1: memref<3xi32, #tpu.memory_space<smem>>) -> (i32, i32, i32) {
    %c0_i32 = arith.constant 0 : i32
    %c0_i32_0 = arith.constant 0 : i32
    %c0_i32_1 = arith.constant 0 : i32
    %c0_i32_2 = arith.constant 0 : i32
    return %c0_i32, %c0_i32_0, %c0_i32_1 : i32, i32, i32
  }
  func.func @transform_2(%arg0: i32, %arg1: memref<3xi32, #tpu.memory_space<smem>>) -> (i32, i32) {
    %c0_i32 = arith.constant 0 : i32
    %c0_i32_0 = arith.constant 0 : i32
    %c0_i32_1 = arith.constant 0 : i32
    return %c0_i32, %c0_i32_0 : i32, i32
  }
  func.func @transform_3(%arg0: i32, %arg1: memref<3xi32, #tpu.memory_space<smem>>) -> (i32, i32, i32) {
    %c0_i32 = arith.constant 0 : i32
    %c0_i32_0 = arith.constant 0 : i32
    %c0_i32_1 = arith.constant 0 : i32
    %c0_i32_2 = arith.constant 0 : i32
    return %c0_i32, %c0_i32_0, %c0_i32_1 : i32, i32, i32
  }
  func.func @transform_4(%arg0: i32, %arg1: memref<3xi32, #tpu.memory_space<smem>>) -> (i32, i32) {
    %c0_i32 = arith.constant 0 : i32
    %c0_i32_0 = arith.constant 0 : i32
    %c0_i32_1 = arith.constant 0 : i32
    return %c0_i32, %c0_i32_0 : i32, i32
  }
  func.func @transform_5(%arg0: i32, %arg1: memref<3xi32, #tpu.memory_space<smem>>) -> (i32, i32) {
    %c0_i32 = arith.constant 0 : i32
    %c0_i32_0 = arith.constant 0 : i32
    %c0_i32_1 = arith.constant 0 : i32
    return %c0_i32, %c0_i32_0 : i32, i32
  }
  func.func @transform_6(%arg0: i32, %arg1: memref<3xi32, #tpu.memory_space<smem>>) -> (i32, i32) {
    %c0_i32 = arith.constant 0 : i32
    %c0_i32_0 = arith.constant 0 : i32
    %c0_i32_1 = arith.constant 0 : i32
    return %c0_i32, %c0_i32_0 : i32, i32
  }
  func.func @transform_7(%arg0: i32, %arg1: memref<3xi32, #tpu.memory_space<smem>>) -> (i32, i32) {
    %c0_i32 = arith.constant 0 : i32
    %c0_i32_0 = arith.constant 0 : i32
    %c0_i32_1 = arith.constant 0 : i32
    return %c0_i32, %c0_i32_0 : i32, i32
  }
  func.func @transform_8(%arg0: i32, %arg1: memref<3xi32, #tpu.memory_space<smem>>) -> (i32, i32) {
    %c0_i32 = arith.constant 0 : i32
    %c0_i32_0 = arith.constant 0 : i32
    %c0_i32_1 = arith.constant 0 : i32
    return %c0_i32, %c0_i32_0 : i32, i32
  }
  func.func @transform_9(%arg0: i32, %arg1: memref<3xi32, #tpu.memory_space<smem>>) -> (i32, i32, i32) {
    %c0_i32 = arith.constant 0 : i32
    %c0_i32_0 = arith.constant 0 : i32
    %c0_i32_1 = arith.constant 0 : i32
    return %arg0, %c0_i32, %c0_i32_0 : i32, i32, i32
  }
  func.func @transform_10(%arg0: i32, %arg1: memref<3xi32, #tpu.memory_space<smem>>) -> (i32, i32, i32) {
    %c0_i32 = arith.constant 0 : i32
    %c0_i32_0 = arith.constant 0 : i32
    %c0_i32_1 = arith.constant 0 : i32
    return %arg0, %c0_i32, %c0_i32_0 : i32, i32, i32
  }
  func.func @transform_11(%arg0: i32, %arg1: memref<3xi32, #tpu.memory_space<smem>>) -> (i32, i32, i32) {
    %c0_i32 = arith.constant 0 : i32
    %c0_i32_0 = arith.constant 0 : i32
    %c0_i32_1 = arith.constant 0 : i32
    return %arg0, %c0_i32, %c0_i32_0 : i32, i32, i32
  }
}

</mosaic_0001>

<llo_original>
// kernel: ac_crop_discriminator_forward.1
$region0: #{ac_crop_discriminator_forward.1}
  #allocation0 [shape = 'u32[]', space=smem, size = 0x4, offset = 0x4, fixed_abs, tag = 'smem constant byte address 0x4 - core index']
  #allocation1 [shape = 'u32[144,128]{1,0:T(1,128)}', space=vmem, size = 0x12000, scoped, tag = 'internal scratch']
  #allocation2 [shape = 's32[1]{0}', space=sflag, size = 0x4, scoped, tag = 'scoped memory for ac_crop_discriminator_forward.1']
  #allocation3 [shape = 'u8[512]{0}', space=smem, size = 0x200, scoped, tag = 'prefetched SMEM operand 0']
  %s0 = inlined_call_operand.vmem [shape: s32[3], index: 0, kind: input, shape index: {}]
  %s1 = inlined_call_operand.vmem [shape: bf16[3,5,4,48], index: 1, kind: input, shape index: {}]
  %s2 = inlined_call_operand.vmem [shape: bf16[3,48,64], index: 2, kind: input, shape index: {}]
  %s3 = inlined_call_operand.vmem [shape: f32[1,64], index: 3, kind: input, shape index: {}]
  %s4 = inlined_call_operand.vmem [shape: bf16[3,64,64], index: 4, kind: input, shape index: {}]
  %s5 = inlined_call_operand.vmem [shape: f32[1,64], index: 5, kind: input, shape index: {}]
  %s6 = inlined_call_operand.vmem [shape: bf16[64,1024], index: 6, kind: input, shape index: {}]
  %s7 = inlined_call_operand.vmem [shape: f32[1,1024], index: 7, kind: input, shape index: {}]
  %s8 = inlined_call_operand.vmem [shape: bf16[1024,128], index: 8, kind: input, shape index: {}]
  %s9 = inlined_call_operand.vmem [shape: f32[1,128], index: 9, kind: input, shape index: {}]
  %s10 = inlined_call_operand.vmem [shape: f32[3,4,128], index: 10, kind: output, shape index: {0}]
  %s11 = inlined_call_operand.vmem [shape: f32[3,4,64], index: 11, kind: output, shape index: {1}]
  %s12 = inlined_call_operand.vmem [shape: f32[3,8,128], index: 12, kind: output, shape index: {2}]
  %13 = xla_tuple %s10, %s11, %s12
  %s14 = sld [smem:[#allocation0]]
  $region85: #{ac_crop_discriminator_forward.1} parent=0
    _
  %s16 = ssub.s32 1, %s14
  %s17 = scalar_select 0, %s16, %s14
  %s18 = sshll.u32 %s0, 4
  %s19 = int_to_ptr.vmem [resolvable:$true] %s18
  %21 = dma.vmem_to_smem %s19, 16, [#allocation3], [#allocation2]
  %22 = dma.done [#allocation2], 16
  %23 = sfence
  loop: start=0, step=1, limit=5
  $region2: #{ac_crop_discriminator_forward.1} parent=0 // loop_pre_header
    _
  $region3: #{ac_crop_discriminator_forward.1} parent=0 // loop_header
    %s25 = sphi 0, %s29
    %p26 = scmp.ge.s32.totalorder %s25, 5
    %s35 = sphi 0, %s37
    %s38 = sphi 0, %s35
    %s39 = sphi 0, %s38
    %s55 = sphi 0, %s39
    %s59 = sphi 0, %s59
    %s61 = sphi 0, %s59
    %s62 = sphi 0, %s61
    %s76 = sphi 0, %s62
    %s80 = sphi 0, %s80
    %s82 = sphi 0, %s80
    %s83 = sphi 0, %s82
    %s97 = sphi 0, %s83
    %s101 = sphi 0, %s101
    %s103 = sphi 0, %s101
    %s104 = sphi 0, %s103
    %s118 = sphi 0, %s104
    %s122 = sphi 0, %s122
    %s124 = sphi 0, %s122
    %s125 = sphi 0, %s124
    %s139 = sphi 0, %s125
    %s143 = sphi 0, %s143
    %s145 = sphi 0, %s143
    %s146 = sphi 0, %s145
    %s160 = sphi 0, %s146
    %s164 = sphi 0, %s164
    %s166 = sphi 0, %s164
    %s167 = sphi 0, %s166
    %s181 = sphi 0, %s167
    %s185 = sphi 0, %s185
    %s187 = sphi 0, %s185
    %s188 = sphi 0, %s187
    %s202 = sphi 0, %s188
    %s206 = sphi 0, %s206
    %s208 = sphi 0, %s206
    %s209 = sphi 0, %s208
    %s223 = sphi 0, %s209
    %s229 = sphi 0, %s231
    %s232 = sphi 0, %s229
    %s233 = sphi 0, %s232
    %s249 = sphi 0, %s233
    %s255 = sphi 0, %s257
    %s258 = sphi 0, %s255
    %s259 = sphi 0, %s258
    %s275 = sphi 0, %s259
    %s281 = sphi 0, %s283
    %s284 = sphi 0, %s281
    %s285 = sphi 0, %s284
    %s301 = sphi 0, %s285
  $region4: #{ac_crop_discriminator_forward.1} parent=0 // loop_header_branch
    %28 = sbr.rel (%p26) target = $region8
  $region5: #{ac_crop_discriminator_forward.1} parent=0 // loop_body
    %s30 = ssub.s32 %s25, 1
    %s31 = ssub.s32 %s25, 2
    %s32 = sadd.s32 %s25, 1
    %s33 = ssub.s32 %s25, %s32
    %p34 = scmp.eq.s32.totalorder %s33, 0
    %s36 = sadd.s32 %s35, 1
    %s37 = scalar_select %p34, %s35, %s36
    %p40 = pneg %p34
    %p41 = scmp.eq.s32.totalorder %s25, 2
    %p42 = por %p40, %p41
    %p43 = scmp.ne.s32.totalorder %s35, %s38
    %p44 = scmp.eq.s32.totalorder %s25, 0
    %p45 = por %p43, %p44
    %p46 = scmp.ne.s32.totalorder %s35, %s38
    %p47 = scmp.eq.s32.totalorder %s30, 2
    %p48 = por %p46, %p47
    %p49 = scmp.ne.s32.totalorder %s38, %s39
    %p50 = scmp.eq.s32.totalorder %s30, 0
    %p51 = por %p49, %p50
    %p52 = scmp.ne.s32.totalorder %s38, %s39
    %p53 = scmp.eq.s32.totalorder %s31, 2
    %p54 = por %p52, %p53
    %p56 = scmp.ne.s32.totalorder %s39, %s55
    %p57 = scmp.eq.s32.totalorder %s31, 0
    %p58 = por %p56, %p57
    %s60 = sadd.s32 %s59, 1
    %p63 = scmp.eq.s32.totalorder %s25, 2
    %p64 = scmp.ne.s32.totalorder %s59, %s61
    %p65 = scmp.eq.s32.totalorder %s25, 0
    %p66 = por %p64, %p65
    %p67 = scmp.ne.s32.totalorder %s59, %s61
    %p68 = scmp.eq.s32.totalorder %s30, 2
    %p69 = por %p67, %p68
    %p70 = scmp.ne.s32.totalorder %s61, %s62
    %p71 = scmp.eq.s32.totalorder %s30, 0
    %p72 = por %p70, %p71
    %p73 = scmp.ne.s32.totalorder %s61, %s62
    %p74 = scmp.eq.s32.totalorder %s31, 2
    %p75 = por %p73, %p74
    %p77 = scmp.ne.s32.totalorder %s62, %s76
    %p78 = scmp.eq.s32.totalorder %s31, 0
    %p79 = por %p77, %p78
    %s81 = sadd.s32 %s80, 1
    %p84 = scmp.eq.s32.totalorder %s25, 2
    %p85 = scmp.ne.s32.totalorder %s80, %s82
    %p86 = scmp.eq.s32.totalorder %s25, 0
    %p87 = por %p85, %p86
    %p88 = scmp.ne.s32.totalorder %s80, %s82
    %p89 = scmp.eq.s32.totalorder %s30, 2
    %p90 = por %p88, %p89
    %p91 = scmp.ne.s32.totalorder %s82, %s83
    %p92 = scmp.eq.s32.totalorder %s30, 0
    %p93 = por %p91, %p92
    %p94 = scmp.ne.s32.totalorder %s82, %s83
    %p95 = scmp.eq.s32.totalorder %s31, 2
    %p96 = por %p94, %p95
    %p98 = scmp.ne.s32.totalorder %s83, %s97
    %p99 = scmp.eq.s32.totalorder %s31, 0
    %p100 = por %p98, %p99
    %s102 = sadd.s32 %s101, 1
    %p105 = scmp.eq.s32.totalorder %s25, 2
    %p106 = scmp.ne.s32.totalorder %s101, %s103
    %p107 = scmp.eq.s32.totalorder %s25, 0
    %p108 = por %p106, %p107
    %p109 = scmp.ne.s32.totalorder %s101, %s103
    %p110 = scmp.eq.s32.totalorder %s30, 2
    %p111 = por %p109, %p110
    %p112 = scmp.ne.s32.totalorder %s103, %s104
    %p113 = scmp.eq.s32.totalorder %s30, 0
    %p114 = por %p112, %p113
    %p115 = scmp.ne.s32.totalorder %s103, %s104
    %p116 = scmp.eq.s32.totalorder %s31, 2
    %p117 = por %p115, %p116
    %p119 = scmp.ne.s32.totalorder %s104, %s118
    %p120 = scmp.eq.s32.totalorder %s31, 0
    %p121 = por %p119, %p120
    %s123 = sadd.s32 %s122, 1
    %p126 = scmp.eq.s32.totalorder %s25, 2
    %p127 = scmp.ne.s32.totalorder %s122, %s124
    %p128 = scmp.eq.s32.totalorder %s25, 0
    %p129 = por %p127, %p128
    %p130 = scmp.ne.s32.totalorder %s122, %s124
    %p131 = scmp.eq.s32.totalorder %s30, 2
    %p132 = por %p130, %p131
    %p133 = scmp.ne.s32.totalorder %s124, %s125
    %p134 = scmp.eq.s32.totalorder %s30, 0
    %p135 = por %p133, %p134
    %p136 = scmp.ne.s32.totalorder %s124, %s125
    %p137 = scmp.eq.s32.totalorder %s31, 2
    %p138 = por %p136, %p137
    %p140 = scmp.ne.s32.totalorder %s125, %s139
    %p141 = scmp.eq.s32.totalorder %s31, 0
    %p142 = por %p140, %p141
    %s144 = sadd.s32 %s143, 1
    %p147 = scmp.eq.s32.totalorder %s25, 2
    %p148 = scmp.ne.s32.totalorder %s143, %s145
    %p149 = scmp.eq.s32.totalorder %s25, 0
    %p150 = por %p148, %p149
    %p151 = scmp.ne.s32.totalorder %s143, %s145
    %p152 = scmp.eq.s32.totalorder %s30, 2
    %p153 = por %p151, %p152
    %p154 = scmp.ne.s32.totalorder %s145, %s146
    %p155 = scmp.eq.s32.totalorder %s30, 0
    %p156 = por %p154, %p155
    %p157 = scmp.ne.s32.totalorder %s145, %s146
    %p158 = scmp.eq.s32.totalorder %s31, 2
    %p159 = por %p157, %p158
    %p161 = scmp.ne.s32.totalorder %s146, %s160
    %p162 = scmp.eq.s32.totalorder %s31, 0
    %p163 = por %p161, %p162
    %s165 = sadd.s32 %s164, 1
    %p168 = scmp.eq.s32.totalorder %s25, 2
    %p169 = scmp.ne.s32.totalorder %s164, %s166
    %p170 = scmp.eq.s32.totalorder %s25, 0
    %p171 = por %p169, %p170
    %p172 = scmp.ne.s32.totalorder %s164, %s166
    %p173 = scmp.eq.s32.totalorder %s30, 2
    %p174 = por %p172, %p173
    %p175 = scmp.ne.s32.totalorder %s166, %s167
    %p176 = scmp.eq.s32.totalorder %s30, 0
    %p177 = por %p175, %p176
    %p178 = scmp.ne.s32.totalorder %s166, %s167
    %p179 = scmp.eq.s32.totalorder %s31, 2
    %p180 = por %p178, %p179
    %p182 = scmp.ne.s32.totalorder %s167, %s181
    %p183 = scmp.eq.s32.totalorder %s31, 0
    %p184 = por %p182, %p183
    %s186 = sadd.s32 %s185, 1
    %p189 = scmp.eq.s32.totalorder %s25, 2
    %p190 = scmp.ne.s32.totalorder %s185, %s187
    %p191 = scmp.eq.s32.totalorder %s25, 0
    %p192 = por %p190, %p191
    %p193 = scmp.ne.s32.totalorder %s185, %s187
    %p194 = scmp.eq.s32.totalorder %s30, 2
    %p195 = por %p193, %p194
    %p196 = scmp.ne.s32.totalorder %s187, %s188
    %p197 = scmp.eq.s32.totalorder %s30, 0
    %p198 = por %p196, %p197
    %p199 = scmp.ne.s32.totalorder %s187, %s188
    %p200 = scmp.eq.s32.totalorder %s31, 2
    %p201 = por %p199, %p200
    %p203 = scmp.ne.s32.totalorder %s188, %s202
    %p204 = scmp.eq.s32.totalorder %s31, 0
    %p205 = por %p203, %p204
    %s207 = sadd.s32 %s206, 1
    %p210 = scmp.eq.s32.totalorder %s25, 2
    %p211 = scmp.ne.s32.totalorder %s206, %s208
    %p212 = scmp.eq.s32.totalorder %s25, 0
    %p213 = por %p211, %p212
    %p214 = scmp.ne.s32.totalorder %s206, %s208
    %p215 = scmp.eq.s32.totalorder %s30, 2
    %p216 = por %p214, %p215
    %p217 = scmp.ne.s32.totalorder %s208, %s209
    %p218 = scmp.eq.s32.totalorder %s30, 0
    %p219 = por %p217, %p218
    %p220 = scmp.ne.s32.totalorder %s208, %s209
    %p221 = scmp.eq.s32.totalorder %s31, 2
    %p222 = por %p220, %p221
    %p224 = scmp.ne.s32.totalorder %s209, %s223
    %p225 = scmp.eq.s32.totalorder %s31, 0
    %p226 = por %p224, %p225
    %s227 = ssub.s32 %s25, %s32
    %p228 = scmp.eq.s32.totalorder %s227, 0
    %s230 = sadd.s32 %s229, 1
    %s231 = scalar_select %p228, %s229, %s230
    %p234 = pneg %p228
    %p235 = scmp.eq.s32.totalorder %s25, 2
    %p236 = por %p234, %p235
    %p237 = scmp.ne.s32.totalorder %s229, %s232
    %p238 = scmp.eq.s32.totalorder %s25, 0
    %p239 = por %p237, %p238
    %p240 = scmp.ne.s32.totalorder %s229, %s232
    %p241 = scmp.eq.s32.totalorder %s30, 2
    %p242 = por %p240, %p241
    %p243 = scmp.ne.s32.totalorder %s232, %s233
    %p244 = scmp.eq.s32.totalorder %s30, 0
    %p245 = por %p243, %p244
    %p246 = scmp.ne.s32.totalorder %s232, %s233
    %p247 = scmp.eq.s32.totalorder %s31, 2
    %p248 = por %p246, %p247
    %p250 = scmp.ne.s32.totalorder %s233, %s249
    %p251 = scmp.eq.s32.totalorder %s31, 0
    %p252 = por %p250, %p251
    %s253 = ssub.s32 %s25, %s32
    %p254 = scmp.eq.s32.totalorder %s253, 0
    %s256 = sadd.s32 %s255, 1
    %s257 = scalar_select %p254, %s255, %s256
    %p260 = pneg %p254
    %p261 = scmp.eq.s32.totalorder %s25, 2
    %p262 = por %p260, %p261
    %p263 = scmp.ne.s32.totalorder %s255, %s258
    %p264 = scmp.eq.s32.totalorder %s25, 0
    %p265 = por %p263, %p264
    %p266 = scmp.ne.s32.totalorder %s255, %s258
    %p267 = scmp.eq.s32.totalorder %s30, 2
    %p268 = por %p266, %p267
    %p269 = scmp.ne.s32.totalorder %s258, %s259
    %p270 = scmp.eq.s32.totalorder %s30, 0
    %p271 = por %p269, %p270
    %p272 = scmp.ne.s32.totalorder %s258, %s259
    %p273 = scmp.eq.s32.totalorder %s31, 2
    %p274 = por %p272, %p273
    %p276 = scmp.ne.s32.totalorder %s259, %s275
    %p277 = scmp.eq.s32.totalorder %s31, 0
    %p278 = por %p276, %p277
    %s279 = ssub.s32 %s25, %s32
    %p280 = scmp.eq.s32.totalorder %s279, 0
    %s282 = sadd.s32 %s281, 1
    %s283 = scalar_select %p280, %s281, %s282
    %p286 = pneg %p280
    %p287 = scmp.eq.s32.totalorder %s25, 2
    %p288 = por %p286, %p287
    %p289 = scmp.ne.s32.totalorder %s281, %s284
    %p290 = scmp.eq.s32.totalorder %s25, 0
    %p291 = por %p289, %p290
    %p292 = scmp.ne.s32.totalorder %s281, %s284
    %p293 = scmp.eq.s32.totalorder %s30, 2
    %p294 = por %p292, %p293
    %p295 = scmp.ne.s32.totalorder %s284, %s285
    %p296 = scmp.eq.s32.totalorder %s30, 0
    %p297 = por %p295, %p296
    %p298 = scmp.ne.s32.totalorder %s284, %s285
    %p299 = scmp.eq.s32.totalorder %s31, 2
    %p300 = por %p298, %p299
    %p302 = scmp.ne.s32.totalorder %s285, %s301
    %p303 = scmp.eq.s32.totalorder %s31, 0
    %p304 = por %p302, %p303
    %p305 = scmp.le.s32.totalorder 1, %s25
    %p306 = scmp.lt.s32.totalorder %s25, 4
    %p307 = pnand %p305, %p306
    %p308 = pneg %p307
    // Predicated region
    $region9: #{ac_crop_discriminator_forward.1} parent=5 // pred_check
      _
    $region10: #{ac_crop_discriminator_forward.1} parent=5 // pred_check_branch
      %310 = sbr.rel (%p307) target = $region12
    $region11: #{ac_crop_discriminator_forward.1} parent=5 // pred_region
      %s311 = ssub.s32 %s25, 1
      // Predicated region
      $region13: #{ac_crop_discriminator_forward.1} parent=11 // pred_check
        %p312 = pneg %p72
      $region14: #{ac_crop_discriminator_forward.1} parent=11 // pred_check_branch
        %314 = sbr.rel (%p312) target = $region16
      $region15: #{ac_crop_discriminator_forward.1} parent=11 // pred_region
        _
      $region16: #{ac_crop_discriminator_forward.1} parent=11 // pred_fallthru
        _
      // Predicated region
      $region17: #{ac_crop_discriminator_forward.1} parent=11 // pred_check
        %p315 = pneg %p93
      $region18: #{ac_crop_discriminator_forward.1} parent=11 // pred_check_branch
        %317 = sbr.rel (%p315) target = $region20
      $region19: #{ac_crop_discriminator_forward.1} parent=11 // pred_region
        _
      $region20: #{ac_crop_discriminator_forward.1} parent=11 // pred_fallthru
        _
      // Predicated region
      $region21: #{ac_crop_discriminator_forward.1} parent=11 // pred_check
        %p318 = pneg %p114
      $region22: #{ac_crop_discriminator_forward.1} parent=11 // pred_check_branch
        %320 = sbr.rel (%p318) target = $region24
      $region23: #{ac_crop_discriminator_forward.1} parent=11 // pred_region
        _
      $region24: #{ac_crop_discriminator_forward.1} parent=11 // pred_fallthru
        _
      // Predicated region
      $region25: #{ac_crop_discriminator_forward.1} parent=11 // pred_check
        %p321 = pneg %p135
      $region26: #{ac_crop_discriminator_forward.1} parent=11 // pred_check_branch
        %323 = sbr.rel (%p321) target = $region28
      $region27: #{ac_crop_discriminator_forward.1} parent=11 // pred_region
        _
      $region28: #{ac_crop_discriminator_forward.1} parent=11 // pred_fallthru
        _
      // Predicated region
      $region29: #{ac_crop_discriminator_forward.1} parent=11 // pred_check
        %p324 = pneg %p156
      $region30: #{ac_crop_discriminator_forward.1} parent=11 // pred_check_branch
        %326 = sbr.rel (%p324) target = $region32
      $region31: #{ac_crop_discriminator_forward.1} parent=11 // pred_region
        _
      $region32: #{ac_crop_discriminator_forward.1} parent=11 // pred_fallthru
        _
      // Predicated region
      $region33: #{ac_crop_discriminator_forward.1} parent=11 // pred_check
        %p327 = pneg %p177
      $region34: #{ac_crop_discriminator_forward.1} parent=11 // pred_check_branch
        %329 = sbr.rel (%p327) target = $region36
      $region35: #{ac_crop_discriminator_forward.1} parent=11 // pred_region
        _
      $region36: #{ac_crop_discriminator_forward.1} parent=11 // pred_fallthru
        _
      // Predicated region
      $region37: #{ac_crop_discriminator_forward.1} parent=11 // pred_check
        %p330 = pneg %p198
      $region38: #{ac_crop_discriminator_forward.1} parent=11 // pred_check_branch
        %332 = sbr.rel (%p330) target = $region40
      $region39: #{ac_crop_discriminator_forward.1} parent=11 // pred_region
        _
      $region40: #{ac_crop_discriminator_forward.1} parent=11 // pred_fallthru
        _
      // Predicated region
      $region41: #{ac_crop_discriminator_forward.1} parent=11 // pred_check
        %p333 = pneg %p219
      $region42: #{ac_crop_discriminator_forward.1} parent=11 // pred_check_branch
        %335 = sbr.rel (%p333) target = $region44
      $region43: #{ac_crop_discriminator_forward.1} parent=11 // pred_region
        _
      $region44: #{ac_crop_discriminator_forward.1} parent=11 // pred_fallthru
        _
    $region12: #{ac_crop_discriminator_forward.1} parent=5 // pred_fallthru
      _
    %p336 = scmp.lt.s32.totalorder %s25, 3
    // Predicated region
    $region45: #{ac_crop_discriminator_forward.1} parent=5 // pred_check
      %p337 = pneg %p336
    $region46: #{ac_crop_discriminator_forward.1} parent=5 // pred_check_branch
      %339 = sbr.rel (%p337) target = $region48
    $region47: #{ac_crop_discriminator_forward.1} parent=5 // pred_region
      // Predicated region
      $region49: #{ac_crop_discriminator_forward.1} parent=47 // pred_check
        %p340 = pneg %p45
      $region50: #{ac_crop_discriminator_forward.1} parent=47 // pred_check_branch
        %342 = sbr.rel (%p340) target = $region52
      $region51: #{ac_crop_discriminator_forward.1} parent=47 // pred_region
        %p343 = scmp.lt.s32.totalorder %s25, 2
        %s344 = scalar_select %p343, %s25, 2
        %s345 = smul.addr %s344, 5
        %s346 = smul.addr %s345, 2
        %s347 = scalar_lea.vmem %s1, %s346
      $region52: #{ac_crop_discriminator_forward.1} parent=47 // pred_fallthru
        _
    $region48: #{ac_crop_discriminator_forward.1} parent=5 // pred_fallthru
      _
    %p348 = scmp.le.s32.totalorder 1, %s25
    %p349 = scmp.lt.s32.totalorder %s25, 4
    %p350 = pnand %p348, %p349
    %p351 = pneg %p350
    // Predicated region
    $region53: #{ac_crop_discriminator_forward.1} parent=5 // pred_check
      _
    $region54: #{ac_crop_discriminator_forward.1} parent=5 // pred_check_branch
      %353 = sbr.rel (%p350) target = $region56
    $region55: #{ac_crop_discriminator_forward.1} parent=5 // pred_region
      %s354 = ssub.s32 %s25, 1
      %p355 = scmp.lt.s32.totalorder %s30, 2
      %s356 = scalar_select %p355, %s30, 2
      %s357 = smul.addr %s356, 5
      %s358 = smul.addr %s357, 2
      %s359 = scalar_lea.vmem %s1, %s358
      %p360 = pneg %p51
      %p361 = pneg %p48
      %p362 = pneg %p72
      %p363 = pneg %p69
      %p364 = pneg %p93
      %p365 = pneg %p90
      %p366 = pneg %p114
      %p367 = pneg %p111
      %p368 = pneg %p135
      %p369 = pneg %p132
      %p370 = pneg %p156
      %p371 = pneg %p153
      %p372 = pneg %p177
      %p373 = pneg %p174
      %p374 = pneg %p198
      %p375 = pneg %p195
      %p376 = pneg %p219
      %p377 = pneg %p216
      %p378 = pneg %p245
      %p379 = pneg %p242
      %p380 = scmp.lt.s32.totalorder %s30, 2
      %s381 = scalar_select %p380, %s30, 2
      %s382 = smul.addr %s381, 4
      %s383 = scalar_lea.vmem %s10, %s382
      %p384 = pneg %p271
      %p385 = pneg %p268
      %p386 = scmp.lt.s32.totalorder %s30, 2
      %s387 = scalar_select %p386, %s30, 2
      %s388 = smul.addr %s387, 4
      %s389 = scalar_lea.vmem %s11, %s388
      %p390 = pneg %p297
      %p391 = pneg %p294
      %p392 = scmp.lt.s32.totalorder %s30, 2
      %s393 = scalar_select %p392, %s30, 2
      %s394 = smul.addr %s393, 8
      %s395 = scalar_lea.vmem %s12, %s394
      %p396 = scmp.lt.s32.totalorder %s30, 2
      %s397 = scalar_select %p396, %s30, 2
      %s398 = smul.addr %s397, 5
      %s399 = smul.addr %s398, 2
      %s400 = scalar_lea.vmem %s1, %s399
      %p401 = scmp.lt.s32.totalorder %s30, 2
      %s402 = scalar_select %p401, %s30, 2
      %s403 = smul.addr %s402, 4
      %s404 = scalar_lea.vmem %s10, %s403
      %p405 = scmp.lt.s32.totalorder %s30, 2
      %s406 = scalar_select %p405, %s30, 2
      %s407 = smul.addr %s406, 4
      %s408 = scalar_lea.vmem %s11, %s407
      %p409 = scmp.lt.s32.totalorder %s30, 2
      %s410 = scalar_select %p409, %s30, 2
      %s411 = smul.addr %s410, 8
      %s412 = scalar_lea.vmem %s12, %s411
      %v414 = vld [vmem:[%s400] sm:$0x3]
      %v415 = vld [vmem:[%s400 + $0x2] sm:$0x3]
      %v416 = vld [vmem:[%s400 + $0x4] sm:$0x3]
      %v417 = vld [vmem:[%s400 + $0x6] sm:$0x3]
      %v418 = vld [vmem:[%s400 + $0x8] sm:$0x3]
      %v419 = vld [vmem:[%s2] sm:$0xf]
      %v420 = vld [vmem:[%s2 + $0x4] sm:$0xf]
      %v421 = vld [vmem:[%s2 + $0x8] sm:$0xf]
      %v422 = vld [vmem:[%s2 + $0xc] sm:$0xf]
      %v423 = vld [vmem:[%s2 + $0x10] sm:$0xf]
      %v424 = vld [vmem:[%s2 + $0x14] sm:$0xf]
      %s425 = scalar_lea.vmem %s2, 24
      %v426 = vld [vmem:[%s425] sm:$0xf]
      %v427 = vld [vmem:[%s425 + $0x4] sm:$0xf]
      %v428 = vld [vmem:[%s425 + $0x8] sm:$0xf]
      %v429 = vld [vmem:[%s425 + $0xc] sm:$0xf]
      %v430 = vld [vmem:[%s425 + $0x10] sm:$0xf]
      %v431 = vld [vmem:[%s425 + $0x14] sm:$0xf]
      %v438 = vunpack.c.l.b16 %v426
      %v439 = vunpack.c.l.b16 %v427
      %v440 = vunpack.c.l.b16 %v428
      %v441 = vunpack.c.l.b16 %v429
      %v442 = vunpack.c.l.b16 %v430
      %v443 = vunpack.c.l.b16 %v431
      %v444 = vpack.c.b16 %v439, %v438
      %v445 = vpack.c.b16 %v441, %v440
      %v446 = vpack.c.b16 %v443, %v442
      %vm450 = vcmask 392192
      %v452 = vsel %vm450, %v415, 0
      %454 = vmatprep.subr.bf16.mxu0 0
      %455 = vmatpush1.bf16.msra.mxu0 %v444
      %456 = vmatprep.subr.bf16.mxu0 0
      %457 = vmatpush1.bf16.msra.mxu0 %v445
      %458 = vmatprep.subr.bf16.mxu0 0
      %459 = vmatpush1.bf16.msra.mxu0 %v446
      %460 = vmatprep.subr.bf16.mxu0 0
      %461 = vmatpush1.bf16.msra.mxu0 0
      %462 = vmatprep.subr.bf16.mxu0 0
      %463 = vmatpush1.bf16.msra.mxu0 0
      %464 = vmatprep.subr.bf16.mxu0 0
      %465 = vmatpush1.bf16.msra.mxu0 0
      %466 = vmatprep.subr.bf16.mxu0 0
      %467 = vmatpush1.bf16.msra.mxu0 0
      %468 = vmatprep.subr.bf16.mxu0 0
      %469 = vmatpush1.bf16.msra.mxu0 0
      %470 = vmatprep.subr.bf16.mxu0 0
      %471 = vmatpush1.bf16.msra.mxu0 0
      %472 = vmatprep.subr.bf16.mxu0 0
      %473 = vmatpush1.bf16.msra.mxu0 0
      %474 = vmatprep.subr.bf16.mxu0 0
      %475 = vmatpush1.bf16.msra.mxu0 0
      %476 = vmatprep.subr.bf16.mxu0 0
      %477 = vmatpush1.bf16.msra.mxu0 0
      %478 = vmatprep.subr.bf16.mxu0 0
      %479 = vmatpush1.bf16.msra.mxu0 0
      %480 = vmatprep.subr.bf16.mxu0 0
      %481 = vmatpush1.bf16.msra.mxu0 0
      %482 = vmatprep.subr.bf16.mxu0 0
      %483 = vmatpush1.bf16.msra.mxu0 0
      %484 = vmatprep.subr.bf16.mxu0 0
      %485 = vmatpush1.bf16.msra.mxu0 0
      %486 = vmatprep.mubr.bf16.mxu0 0
      %487 = vmatmul.mubr.bf16.gmra.mrb[0].mxu0 %v452
      %v488 = vpop.f32.mrb[0].mxu0
      %v489 = vadd.f32 0.0, %v488
      %v490 = vpop.f32.mrb[0].mxu0
      %v491 = vpop.f32.mrb[0].mxu0
      %v492 = vpop.f32.mrb[0].mxu0
      %493 = vdwg.mxu0
      %v500 = vunpack.c.l.b16 %v419
      %v501 = vunpack.c.l.b16 %v420
      %v502 = vunpack.c.l.b16 %v421
      %v503 = vunpack.c.l.b16 %v422
      %v504 = vunpack.c.l.b16 %v423
      %v505 = vunpack.c.l.b16 %v424
      %v506 = vpack.c.b16 %v501, %v500
      %v507 = vpack.c.b16 %v503, %v502
      %v508 = vpack.c.b16 %v505, %v504
      %v513 = vsel %vm450, %v414, 0
      %515 = vmatprep.subr.bf16.mxu0 0
      %516 = vmatpush1.bf16.msra.mxu0 %v506
      %517 = vmatprep.subr.bf16.mxu0 0
      %518 = vmatpush1.bf16.msra.mxu0 %v507
      %519 = vmatprep.subr.bf16.mxu0 0
      %520 = vmatpush1.bf16.msra.mxu0 %v508
      %521 = vmatprep.subr.bf16.mxu0 0
      %522 = vmatpush1.bf16.msra.mxu0 0
      %523 = vmatprep.subr.bf16.mxu0 0
      %524 = vmatpush1.bf16.msra.mxu0 0
      %525 = vmatprep.subr.bf16.mxu0 0
      %526 = vmatpush1.bf16.msra.mxu0 0
      %527 = vmatprep.subr.bf16.mxu0 0
      %528 = vmatpush1.bf16.msra.mxu0 0
      %529 = vmatprep.subr.bf16.mxu0 0
      %530 = vmatpush1.bf16.msra.mxu0 0
      %531 = vmatprep.subr.bf16.mxu0 0
      %532 = vmatpush1.bf16.msra.mxu0 0
      %533 = vmatprep.subr.bf16.mxu0 0
      %534 = vmatpush1.bf16.msra.mxu0 0
      %535 = vmatprep.subr.bf16.mxu0 0
      %536 = vmatpush1.bf16.msra.mxu0 0
      %537 = vmatprep.subr.bf16.mxu0 0
      %538 = vmatpush1.bf16.msra.mxu0 0
      %539 = vmatprep.subr.bf16.mxu0 0
      %540 = vmatpush1.bf16.msra.mxu0 0
      %541 = vmatprep.subr.bf16.mxu0 0
      %542 = vmatpush1.bf16.msra.mxu0 0
      %543 = vmatprep.subr.bf16.mxu0 0
      %544 = vmatpush1.bf16.msra.mxu0 0
      %545 = vmatprep.subr.bf16.mxu0 0
      %546 = vmatpush1.bf16.msra.mxu0 0
      %547 = vmatprep.mubr.bf16.mxu0 0
      %548 = vmatmul.mubr.bf16.gmra.mrb[0].mxu0 %v513
      %v549 = vpop.f32.mrb[0].mxu0
      %v550 = vadd.f32 %v489, %v549
      %v551 = vpop.f32.mrb[0].mxu0
      %v552 = vpop.f32.mrb[0].mxu0
      %v553 = vpop.f32.mrb[0].mxu0
      %554 = vdwg.mxu0
      %s555 = scalar_lea.vmem %s2, 48
      %v556 = vld [vmem:[%s555] sm:$0xf]
      %v557 = vld [vmem:[%s555 + $0x4] sm:$0xf]
      %v558 = vld [vmem:[%s555 + $0x8] sm:$0xf]
      %v559 = vld [vmem:[%s555 + $0xc] sm:$0xf]
      %v560 = vld [vmem:[%s555 + $0x10] sm:$0xf]
      %v561 = vld [vmem:[%s555 + $0x14] sm:$0xf]
      %v568 = vunpack.c.l.b16 %v556
      %v569 = vunpack.c.l.b16 %v557
      %v570 = vunpack.c.l.b16 %v558
      %v571 = vunpack.c.l.b16 %v559
      %v572 = vunpack.c.l.b16 %v560
      %v573 = vunpack.c.l.b16 %v561
      %v574 = vpack.c.b16 %v569, %v568
      %v575 = vpack.c.b16 %v571, %v570
      %v576 = vpack.c.b16 %v573, %v572
      %v581 = vsel %vm450, %v416, 0
      %583 = vmatprep.subr.bf16.mxu0 0
      %584 = vmatpush1.bf16.msra.mxu0 %v574
      %585 = vmatprep.subr.bf16.mxu0 0
      %586 = vmatpush1.bf16.msra.mxu0 %v575
      %587 = vmatprep.subr.bf16.mxu0 0
      %588 = vmatpush1.bf16.msra.mxu0 %v576
      %589 = vmatprep.subr.bf16.mxu0 0
      %590 = vmatpush1.bf16.msra.mxu0 0
      %591 = vmatprep.subr.bf16.mxu0 0
      %592 = vmatpush1.bf16.msra.mxu0 0
      %593 = vmatprep.subr.bf16.mxu0 0
      %594 = vmatpush1.bf16.msra.mxu0 0
      %595 = vmatprep.subr.bf16.mxu0 0
      %596 = vmatpush1.bf16.msra.mxu0 0
      %597 = vmatprep.subr.bf16.mxu0 0
      %598 = vmatpush1.bf16.msra.mxu0 0
      %599 = vmatprep.subr.bf16.mxu0 0
      %600 = vmatpush1.bf16.msra.mxu0 0
      %601 = vmatprep.subr.bf16.mxu0 0
      %602 = vmatpush1.bf16.msra.mxu0 0
      %603 = vmatprep.subr.bf16.mxu0 0
      %604 = vmatpush1.bf16.msra.mxu0 0
      %605 = vmatprep.subr.bf16.mxu0 0
      %606 = vmatpush1.bf16.msra.mxu0 0
      %607 = vmatprep.subr.bf16.mxu0 0
      %608 = vmatpush1.bf16.msra.mxu0 0
      %609 = vmatprep.subr.bf16.mxu0 0
      %610 = vmatpush1.bf16.msra.mxu0 0
      %611 = vmatprep.subr.bf16.mxu0 0
      %612 = vmatpush1.bf16.msra.mxu0 0
      %613 = vmatprep.subr.bf16.mxu0 0
      %614 = vmatpush1.bf16.msra.mxu0 0
      %615 = vmatprep.mubr.bf16.mxu0 0
      %616 = vmatmul.mubr.bf16.gmra.mrb[0].mxu0 %v581
      %v617 = vpop.f32.mrb[0].mxu0
      %v618 = vadd.f32 0.0, %v617
      %v619 = vpop.f32.mrb[0].mxu0
      %v620 = vpop.f32.mrb[0].mxu0
      %v621 = vpop.f32.mrb[0].mxu0
      %622 = vdwg.mxu0
      %v623 = vadd.f32 %v550, %v618
      %v624 = vld [vmem:[%s3] sm:$0x1]
      %v626 = vlaneseq
      %v627 = vshrl.u32 %v626, 7
      %v628 = vsub.s32 0, %v627
      %v629 = vrot.slane %v624, %v628
      %v631 = vadd.f32 %v623, %v629
      %v633 = vsel %vm450, %v417, 0
      %635 = vmatprep.subr.bf16.mxu0 0
      %636 = vmatpush1.bf16.msra.mxu0 %v444
      %637 = vmatprep.subr.bf16.mxu0 0
      %638 = vmatpush1.bf16.msra.mxu0 %v445
      %639 = vmatprep.subr.bf16.mxu0 0
      %640 = vmatpush1.bf16.msra.mxu0 %v446
      %641 = vmatprep.subr.bf16.mxu0 0
      %642 = vmatpush1.bf16.msra.mxu0 0
      %643 = vmatprep.subr.bf16.mxu0 0
      %644 = vmatpush1.bf16.msra.mxu0 0
      %645 = vmatprep.subr.bf16.mxu0 0
      %646 = vmatpush1.bf16.msra.mxu0 0
      %647 = vmatprep.subr.bf16.mxu0 0
      %648 = vmatpush1.bf16.msra.mxu0 0
      %649 = vmatprep.subr.bf16.mxu0 0
      %650 = vmatpush1.bf16.msra.mxu0 0
      %651 = vmatprep.subr.bf16.mxu0 0
      %652 = vmatpush1.bf16.msra.mxu0 0
      %653 = vmatprep.subr.bf16.mxu0 0
      %654 = vmatpush1.bf16.msra.mxu0 0
      %655 = vmatprep.subr.bf16.mxu0 0
      %656 = vmatpush1.bf16.msra.mxu0 0
      %657 = vmatprep.subr.bf16.mxu0 0
      %658 = vmatpush1.bf16.msra.mxu0 0
      %659 = vmatprep.subr.bf16.mxu0 0
      %660 = vmatpush1.bf16.msra.mxu0 0
      %661 = vmatprep.subr.bf16.mxu0 0
      %662 = vmatpush1.bf16.msra.mxu0 0
      %663 = vmatprep.subr.bf16.mxu0 0
      %664 = vmatpush1.bf16.msra.mxu0 0
      %665 = vmatprep.subr.bf16.mxu0 0
      %666 = vmatpush1.bf16.msra.mxu0 0
      %667 = vmatprep.mubr.bf16.mxu0 0
      %668 = vmatmul.mubr.bf16.gmra.mrb[0].mxu0 %v633
      %v669 = vpop.f32.mrb[0].mxu0
      %v670 = vadd.f32 0.0, %v669
      %v671 = vpop.f32.mrb[0].mxu0
      %v672 = vpop.f32.mrb[0].mxu0
      %v673 = vpop.f32.mrb[0].mxu0
      %674 = vdwg.mxu0
      %675 = vmatprep.subr.bf16.mxu0 0
      %676 = vmatpush1.bf16.msra.mxu0 %v506
      %677 = vmatprep.subr.bf16.mxu0 0
      %678 = vmatpush1.bf16.msra.mxu0 %v507
      %679 = vmatprep.subr.bf16.mxu0 0
      %680 = vmatpush1.bf16.msra.mxu0 %v508
      %681 = vmatprep.subr.bf16.mxu0 0
      %682 = vmatpush1.bf16.msra.mxu0 0
      %683 = vmatprep.subr.bf16.mxu0 0
      %684 = vmatpush1.bf16.msra.mxu0 0
      %685 = vmatprep.subr.bf16.mxu0 0
      %686 = vmatpush1.bf16.msra.mxu0 0
      %687 = vmatprep.subr.bf16.mxu0 0
      %688 = vmatpush1.bf16.msra.mxu0 0
      %689 = vmatprep.subr.bf16.mxu0 0
      %690 = vmatpush1.bf16.msra.mxu0 0
      %691 = vmatprep.subr.bf16.mxu0 0
      %692 = vmatpush1.bf16.msra.mxu0 0
      %693 = vmatprep.subr.bf16.mxu0 0
      %694 = vmatpush1.bf16.msra.mxu0 0
      %695 = vmatprep.subr.bf16.mxu0 0
      %696 = vmatpush1.bf16.msra.mxu0 0
      %697 = vmatprep.subr.bf16.mxu0 0
      %698 = vmatpush1.bf16.msra.mxu0 0
      %699 = vmatprep.subr.bf16.mxu0 0
      %700 = vmatpush1.bf16.msra.mxu0 0
      %701 = vmatprep.subr.bf16.mxu0 0
      %702 = vmatpush1.bf16.msra.mxu0 0
      %703 = vmatprep.subr.bf16.mxu0 0
      %704 = vmatpush1.bf16.msra.mxu0 0
      %705 = vmatprep.subr.bf16.mxu0 0
      %706 = vmatpush1.bf16.msra.mxu0 0
      %707 = vmatprep.mubr.bf16.mxu0 0
      %708 = vmatmul.mubr.bf16.gmra.mrb[0].mxu0 %v581
      %v709 = vpop.f32.mrb[0].mxu0
      %v710 = vadd.f32 %v670, %v709
      %v711 = vpop.f32.mrb[0].mxu0
      %v712 = vpop.f32.mrb[0].mxu0
      %v713 = vpop.f32.mrb[0].mxu0
      %714 = vdwg.mxu0
      %v716 = vsel %vm450, %v418, 0
      %718 = vmatprep.subr.bf16.mxu0 0
      %719 = vmatpush1.bf16.msra.mxu0 %v574
      %720 = vmatprep.subr.bf16.mxu0 0
      %721 = vmatpush1.bf16.msra.mxu0 %v575
      %722 = vmatprep.subr.bf16.mxu0 0
      %723 = vmatpush1.bf16.msra.mxu0 %v576
      %724 = vmatprep.subr.bf16.mxu0 0
      %725 = vmatpush1.bf16.msra.mxu0 0
      %726 = vmatprep.subr.bf16.mxu0 0
      %727 = vmatpush1.bf16.msra.mxu0 0
      %728 = vmatprep.subr.bf16.mxu0 0
      %729 = vmatpush1.bf16.msra.mxu0 0
      %730 = vmatprep.subr.bf16.mxu0 0
      %731 = vmatpush1.bf16.msra.mxu0 0
      %732 = vmatprep.subr.bf16.mxu0 0
      %733 = vmatpush1.bf16.msra.mxu0 0
      %734 = vmatprep.subr.bf16.mxu0 0
      %735 = vmatpush1.bf16.msra.mxu0 0
      %736 = vmatprep.subr.bf16.mxu0 0
      %737 = vmatpush1.bf16.msra.mxu0 0
      %738 = vmatprep.subr.bf16.mxu0 0
      %739 = vmatpush1.bf16.msra.mxu0 0
      %740 = vmatprep.subr.bf16.mxu0 0
      %741 = vmatpush1.bf16.msra.mxu0 0
      %742 = vmatprep.subr.bf16.mxu0 0
      %743 = vmatpush1.bf16.msra.mxu0 0
      %744 = vmatprep.subr.bf16.mxu0 0
      %745 = vmatpush1.bf16.msra.mxu0 0
      %746 = vmatprep.subr.bf16.mxu0 0
      %747 = vmatpush1.bf16.msra.mxu0 0
      %748 = vmatprep.subr.bf16.mxu0 0
      %749 = vmatpush1.bf16.msra.mxu0 0
      %750 = vmatprep.mubr.bf16.mxu0 0
      %751 = vmatmul.mubr.bf16.gmra.mrb[0].mxu0 %v716
      %v752 = vpop.f32.mrb[0].mxu0
      %v753 = vadd.f32 0.0, %v752
      %v754 = vpop.f32.mrb[0].mxu0
      %v755 = vpop.f32.mrb[0].mxu0
      %v756 = vpop.f32.mrb[0].mxu0
      %757 = vdwg.mxu0
      %v758 = vadd.f32 %v710, %v753
      %v759 = vadd.f32 %v758, %v629
      %761 = vrot.lane.b32.xlu0 %v759, 64
      %v762 = vpop.permute.xlu0 %761
      %vm764 = vcmask 523264
      %v765 = vsel %vm764, %v631, %v762
      %766 = vst [vmem:[%s404] sm:$0xf] %v765
      %v767 = vmax.f32 %v631, 0.0
      %v768 = vpack.c.bf16 %v767, %v767
      %v769 = vmax.f32 %v759, 0.0
      %v770 = vpack.c.bf16 %v769, %v769
      %v771 = vld [vmem:[%s4] sm:$0xf]
      %v772 = vld [vmem:[%s4 + $0x4] sm:$0xf]
      %v773 = vld [vmem:[%s4 + $0x8] sm:$0xf]
      %v774 = vld [vmem:[%s4 + $0xc] sm:$0xf]
      %v775 = vld [vmem:[%s4 + $0x10] sm:$0xf]
      %v776 = vld [vmem:[%s4 + $0x14] sm:$0xf]
      %v777 = vld [vmem:[%s4 + $0x18] sm:$0xf]
      %v778 = vld [vmem:[%s4 + $0x1c] sm:$0xf]
      %v787 = vunpack.c.l.b16 %v771
      %v788 = vunpack.c.l.b16 %v772
      %v789 = vunpack.c.l.b16 %v773
      %v790 = vunpack.c.l.b16 %v774
      %v791 = vunpack.c.l.b16 %v775
      %v792 = vunpack.c.l.b16 %v776
      %v793 = vunpack.c.l.b16 %v777
      %v794 = vunpack.c.l.b16 %v778
      %v795 = vpack.c.b16 %v788, %v787
      %v796 = vpack.c.b16 %v790, %v789
      %v797 = vpack.c.b16 %v792, %v791
      %v798 = vpack.c.b16 %v794, %v793
      %v804 = vsel %vm764, %v770, 0
      %806 = vmatprep.subr.bf16.mxu0 0
      %807 = vmatpush1.bf16.msra.mxu0 %v795
      %808 = vmatprep.subr.bf16.mxu0 0
      %809 = vmatpush1.bf16.msra.mxu0 %v796
      %810 = vmatprep.subr.bf16.mxu0 0
      %811 = vmatpush1.bf16.msra.mxu0 %v797
      %812 = vmatprep.subr.bf16.mxu0 0
      %813 = vmatpush1.bf16.msra.mxu0 %v798
      %814 = vmatprep.subr.bf16.mxu0 0
      %815 = vmatpush1.bf16.msra.mxu0 0
      %816 = vmatprep.subr.bf16.mxu0 0
      %817 = vmatpush1.bf16.msra.mxu0 0
      %818 = vmatprep.subr.bf16.mxu0 0
      %819 = vmatpush1.bf16.msra.mxu0 0
      %820 = vmatprep.subr.bf16.mxu0 0
      %821 = vmatpush1.bf16.msra.mxu0 0
      %822 = vmatprep.subr.bf16.mxu0 0
      %823 = vmatpush1.bf16.msra.mxu0 0
      %824 = vmatprep.subr.bf16.mxu0 0
      %825 = vmatpush1.bf16.msra.mxu0 0
      %826 = vmatprep.subr.bf16.mxu0 0
      %827 = vmatpush1.bf16.msra.mxu0 0
      %828 = vmatprep.subr.bf16.mxu0 0
      %829 = vmatpush1.bf16.msra.mxu0 0
      %830 = vmatprep.subr.bf16.mxu0 0
      %831 = vmatpush1.bf16.msra.mxu0 0
      %832 = vmatprep.subr.bf16.mxu0 0
      %833 = vmatpush1.bf16.msra.mxu0 0
      %834 = vmatprep.subr.bf16.mxu0 0
      %835 = vmatpush1.bf16.msra.mxu0 0
      %836 = vmatprep.subr.bf16.mxu0 0
      %837 = vmatpush1.bf16.msra.mxu0 0
      %838 = vmatprep.mubr.bf16.mxu0 0
      %839 = vmatmul.mubr.bf16.gmra.mrb[0].mxu0 %v804
      %v840 = vpop.f32.mrb[0].mxu0
      %v841 = vadd.f32 0.0, %v840
      %v842 = vpop.f32.mrb[0].mxu0
      %v843 = vpop.f32.mrb[0].mxu0
      %v844 = vpop.f32.mrb[0].mxu0
      %845 = vdwg.mxu0
      %v846 = vlaneseq
      %v847 = vshrl.u32 %v846, 7
      %v848 = vlaneseq
      %v849 = vand.u32 %v848, 127
      %v850 = vadd.s32 %v849, 1
      %vm851 = vcmp.eq.s32.totalorder %v847, %v850
      %v852 = vsel %vm851, 1, 0
      %v853 = vcvt.s32.f32 %v852
      %s854 = scalar_lea.vmem %s4, 32
      %v855 = vld [vmem:[%s854] sm:$0xf]
      %v856 = vld [vmem:[%s854 + $0x4] sm:$0xf]
      %v857 = vld [vmem:[%s854 + $0x8] sm:$0xf]
      %v858 = vld [vmem:[%s854 + $0xc] sm:$0xf]
      %v859 = vld [vmem:[%s854 + $0x10] sm:$0xf]
      %v860 = vld [vmem:[%s854 + $0x14] sm:$0xf]
      %v861 = vld [vmem:[%s854 + $0x18] sm:$0xf]
      %v862 = vld [vmem:[%s854 + $0x1c] sm:$0xf]
      %v871 = vunpack.c.l.b16 %v855
      %v872 = vunpack.c.l.b16 %v856
      %v873 = vunpack.c.l.b16 %v857
      %v874 = vunpack.c.l.b16 %v858
      %v875 = vunpack.c.l.b16 %v859
      %v876 = vunpack.c.l.b16 %v860
      %v877 = vunpack.c.l.b16 %v861
      %v878 = vunpack.c.l.b16 %v862
      %v879 = vpack.c.b16 %v872, %v871
      %v880 = vpack.c.b16 %v874, %v873
      %v881 = vpack.c.b16 %v876, %v875
      %v882 = vpack.c.b16 %v878, %v877
      %v888 = vsel %vm764, %v768, 0
      %890 = vmatprep.subr.bf16.mxu0 0
      %891 = vmatpush1.bf16.msra.mxu0 %v879
      %892 = vmatprep.subr.bf16.mxu0 0
      %893 = vmatpush1.bf16.msra.mxu0 %v880
      %894 = vmatprep.subr.bf16.mxu0 0
      %895 = vmatpush1.bf16.msra.mxu0 %v881
      %896 = vmatprep.subr.bf16.mxu0 0
      %897 = vmatpush1.bf16.msra.mxu0 %v882
      %898 = vmatprep.subr.bf16.mxu0 0
      %899 = vmatpush1.bf16.msra.mxu0 0
      %900 = vmatprep.subr.bf16.mxu0 0
      %901 = vmatpush1.bf16.msra.mxu0 0
      %902 = vmatprep.subr.bf16.mxu0 0
      %903 = vmatpush1.bf16.msra.mxu0 0
      %904 = vmatprep.subr.bf16.mxu0 0
      %905 = vmatpush1.bf16.msra.mxu0 0
      %906 = vmatprep.subr.bf16.mxu0 0
      %907 = vmatpush1.bf16.msra.mxu0 0
      %908 = vmatprep.subr.bf16.mxu0 0
      %909 = vmatpush1.bf16.msra.mxu0 0
      %910 = vmatprep.subr.bf16.mxu0 0
      %911 = vmatpush1.bf16.msra.mxu0 0
      %912 = vmatprep.subr.bf16.mxu0 0
      %913 = vmatpush1.bf16.msra.mxu0 0
      %914 = vmatprep.subr.bf16.mxu0 0
      %915 = vmatpush1.bf16.msra.mxu0 0
      %916 = vmatprep.subr.bf16.mxu0 0
      %917 = vmatpush1.bf16.msra.mxu0 0
      %918 = vmatprep.subr.bf16.mxu0 0
      %919 = vmatpush1.bf16.msra.mxu0 0
      %920 = vmatprep.subr.bf16.mxu0 0
      %921 = vmatpush1.bf16.msra.mxu0 0
      %922 = vmatprep.mubr.bf16.mxu0 0
      %923 = vmatmul.mubr.bf16.gmra.mrb[0].mxu0 %v888
      %v924 = vpop.f32.mrb[0].mxu0
      %v925 = vadd.f32 0.0, %v924
      %v926 = vpop.f32.mrb[0].mxu0
      %v927 = vpop.f32.mrb[0].mxu0
      %v928 = vpop.f32.mrb[0].mxu0
      %929 = vdwg.mxu0
      %vm930 = vcmask 31744
      %v932 = vsel %vm930, %v853, 0
      %vm934 = vcmask 1043456
      %v936 = vsel %vm934, %v841, 0
      %938 = vmatprep.subr.mxu0 0.0
      %939 = vmatpush1.msra.mxu0 %v936
      %940 = vmatprep.subr.mxu0 0.0
      %941 = vmatpush1.msra.mxu0 0.0
      %942 = vmatprep.subr.mxu0 0.0
      %943 = vmatpush1.msra.mxu0 0.0
      %944 = vmatprep.subr.mxu0 0.0
      %945 = vmatpush1.msra.mxu0 0.0
      %946 = vmatprep.subr.mxu0 0.0
      %947 = vmatpush1.msra.mxu0 0.0
      %948 = vmatprep.subr.mxu0 0.0
      %949 = vmatpush1.msra.mxu0 0.0
      %950 = vmatprep.subr.mxu0 0.0
      %951 = vmatpush1.msra.mxu0 0.0
      %952 = vmatprep.subr.mxu0 0.0
      %953 = vmatpush1.msra.mxu0 0.0
      %954 = vmatprep.subr.mxu0 0.0
      %955 = vmatpush1.msra.mxu0 0.0
      %956 = vmatprep.subr.mxu0 0.0
      %957 = vmatpush1.msra.mxu0 0.0
      %958 = vmatprep.subr.mxu0 0.0
      %959 = vmatpush1.msra.mxu0 0.0
      %960 = vmatprep.subr.mxu0 0.0
      %961 = vmatpush1.msra.mxu0 0.0
      %962 = vmatprep.subr.mxu0 0.0
      %963 = vmatpush1.msra.mxu0 0.0
      %964 = vmatprep.subr.mxu0 0.0
      %965 = vmatpush1.msra.mxu0 0.0
      %966 = vmatprep.subr.mxu0 0.0
      %967 = vmatpush1.msra.mxu0 0.0
      %968 = vmatprep.subr.mxu0 0.0
      %969 = vmatpush1.msra.mxu0 0.0
      %970 = vmatprep.subr.mxu0 0.0
      %971 = vmatpush1.msra.mxu0 0.0
      %972 = vmatprep.subr.mxu0 0.0
      %973 = vmatpush1.msra.mxu0 0.0
      %974 = vmatprep.subr.mxu0 0.0
      %975 = vmatpush1.msra.mxu0 0.0
      %976 = vmatprep.subr.mxu0 0.0
      %977 = vmatpush1.msra.mxu0 0.0
      %978 = vmatprep.subr.mxu0 0.0
      %979 = vmatpush1.msra.mxu0 0.0
      %980 = vmatprep.subr.mxu0 0.0
      %981 = vmatpush1.msra.mxu0 0.0
      %982 = vmatprep.subr.mxu0 0.0
      %983 = vmatpush1.msra.mxu0 0.0
      %984 = vmatprep.subr.mxu0 0.0
      %985 = vmatpush1.msra.mxu0 0.0
      %986 = vmatprep.subr.mxu0 0.0
      %987 = vmatpush1.msra.mxu0 0.0
      %988 = vmatprep.subr.mxu0 0.0
      %989 = vmatpush1.msra.mxu0 0.0
      %990 = vmatprep.subr.mxu0 0.0
      %991 = vmatpush1.msra.mxu0 0.0
      %992 = vmatprep.subr.mxu0 0.0
      %993 = vmatpush1.msra.mxu0 0.0
      %994 = vmatprep.subr.mxu0 0.0
      %995 = vmatpush1.msra.mxu0 0.0
      %996 = vmatprep.subr.mxu0 0.0
      %997 = vmatpush1.msra.mxu0 0.0
      %998 = vmatprep.subr.mxu0 0.0
      %999 = vmatpush1.msra.mxu0 0.0
      %1000 = vmatprep.subr.mxu0 0.0
      %1001 = vmatpush1.msra.mxu0 0.0
      %1002 = vmatprep.mubr.f32.mxu0 0.0
      %1003 = vmatmul.mubr.f32.gmra.mrb[0].mxu0 %v932
      %v1004 = vpop.f32.mrb[0].mxu0
      %v1005 = vadd.f32 %v925, %v1004
      %v1006 = vpop.f32.mrb[0].mxu0
      %1007 = vdwg.mxu0
      %s1008 = scalar_lea.vmem %s4, 64
      %v1009 = vld [vmem:[%s1008] sm:$0xf]
      %v1010 = vld [vmem:[%s1008 + $0x4] sm:$0xf]
      %v1011 = vld [vmem:[%s1008 + $0x8] sm:$0xf]
      %v1012 = vld [vmem:[%s1008 + $0xc] sm:$0xf]
      %v1013 = vld [vmem:[%s1008 + $0x10] sm:$0xf]
      %v1014 = vld [vmem:[%s1008 + $0x14] sm:$0xf]
      %v1015 = vld [vmem:[%s1008 + $0x18] sm:$0xf]
      %v1016 = vld [vmem:[%s1008 + $0x1c] sm:$0xf]
      %v1025 = vunpack.c.l.b16 %v1009
      %v1026 = vunpack.c.l.b16 %v1010
      %v1027 = vunpack.c.l.b16 %v1011
      %v1028 = vunpack.c.l.b16 %v1012
      %v1029 = vunpack.c.l.b16 %v1013
      %v1030 = vunpack.c.l.b16 %v1014
      %v1031 = vunpack.c.l.b16 %v1015
      %v1032 = vunpack.c.l.b16 %v1016
      %v1033 = vpack.c.b16 %v1026, %v1025
      %v1034 = vpack.c.b16 %v1028, %v1027
      %v1035 = vpack.c.b16 %v1030, %v1029
      %v1036 = vpack.c.b16 %v1032, %v1031
      %1041 = vmatprep.subr.bf16.mxu0 0
      %1042 = vmatpush1.bf16.msra.mxu0 %v1033
      %1043 = vmatprep.subr.bf16.mxu0 0
      %1044 = vmatpush1.bf16.msra.mxu0 %v1034
      %1045 = vmatprep.subr.bf16.mxu0 0
      %1046 = vmatpush1.bf16.msra.mxu0 %v1035
      %1047 = vmatprep.subr.bf16.mxu0 0
      %1048 = vmatpush1.bf16.msra.mxu0 %v1036
      %1049 = vmatprep.subr.bf16.mxu0 0
      %1050 = vmatpush1.bf16.msra.mxu0 0
      %1051 = vmatprep.subr.bf16.mxu0 0
      %1052 = vmatpush1.bf16.msra.mxu0 0
      %1053 = vmatprep.subr.bf16.mxu0 0
      %1054 = vmatpush1.bf16.msra.mxu0 0
      %1055 = vmatprep.subr.bf16.mxu0 0
      %1056 = vmatpush1.bf16.msra.mxu0 0
      %1057 = vmatprep.subr.bf16.mxu0 0
      %1058 = vmatpush1.bf16.msra.mxu0 0
      %1059 = vmatprep.subr.bf16.mxu0 0
      %1060 = vmatpush1.bf16.msra.mxu0 0
      %1061 = vmatprep.subr.bf16.mxu0 0
      %1062 = vmatpush1.bf16.msra.mxu0 0
      %1063 = vmatprep.subr.bf16.mxu0 0
      %1064 = vmatpush1.bf16.msra.mxu0 0
      %1065 = vmatprep.subr.bf16.mxu0 0
      %1066 = vmatpush1.bf16.msra.mxu0 0
      %1067 = vmatprep.subr.bf16.mxu0 0
      %1068 = vmatpush1.bf16.msra.mxu0 0
      %1069 = vmatprep.subr.bf16.mxu0 0
      %1070 = vmatpush1.bf16.msra.mxu0 0
      %1071 = vmatprep.subr.bf16.mxu0 0
      %1072 = vmatpush1.bf16.msra.mxu0 0
      %1073 = vmatprep.mubr.bf16.mxu0 0
      %1074 = vmatmul.mubr.bf16.gmra.mrb[0].mxu0 %v804
      %v1075 = vpop.f32.mrb[0].mxu0
      %v1076 = vadd.f32 0.0, %v1075
      %v1077 = vpop.f32.mrb[0].mxu0
      %v1078 = vpop.f32.mrb[0].mxu0
      %v1079 = vpop.f32.mrb[0].mxu0
      %1080 = vdwg.mxu0
      %v1081 = vadd.f32 %v1005, %v1076
      %v1082 = vld [vmem:[%s5] sm:$0x1]
      %v1084 = vlaneseq
      %v1085 = vshrl.u32 %v1084, 7
      %v1086 = vsub.s32 0, %v1085
      %v1087 = vrot.slane %v1082, %v1086
      %v1089 = vadd.f32 %v1081, %v1087
      %v1090 = vmax.f32 %v1089, 0.0
      %vm1091 = vcmask 519168
      %1092 = vst.msk [vmem:[%s408] sm:$0xf] %vm1091, %v1090
      %v1093 = vsel %vm1091, %v1090, 0.0
      %v1094 = vrot.slane %v1093, 4
      %v1095 = vadd.f32 %v1093, %v1094
      %v1096 = vrot.slane %v1095, 2
      %v1097 = vadd.f32 %v1095, %v1096
      %v1098 = vrot.slane %v1097, 1
      %v1099 = vadd.f32 %v1097, %v1098
      %v1100 = vpack.c.bf16 %v1099, %v1099
      %v1101 = vld [vmem:[%s6] sm:$0xff]
      %v1102 = vld [vmem:[%s6 + $0x8] sm:$0xff]
      %v1103 = vld [vmem:[%s6 + $0x10] sm:$0xff]
      %v1104 = vld [vmem:[%s6 + $0x18] sm:$0xff]
      %v1105 = vld [vmem:[%s6 + $0x20] sm:$0xff]
      %v1106 = vld [vmem:[%s6 + $0x28] sm:$0xff]
      %v1107 = vld [vmem:[%s6 + $0x30] sm:$0xff]
      %v1108 = vld [vmem:[%s6 + $0x38] sm:$0xff]
      %v1109 = vld [vmem:[%s6 + $0x40] sm:$0xff]
      %v1110 = vld [vmem:[%s6 + $0x48] sm:$0xff]
      %v1111 = vld [vmem:[%s6 + $0x50] sm:$0xff]
      %v1112 = vld [vmem:[%s6 + $0x58] sm:$0xff]
      %v1113 = vld [vmem:[%s6 + $0x60] sm:$0xff]
      %v1114 = vld [vmem:[%s6 + $0x68] sm:$0xff]
      %v1115 = vld [vmem:[%s6 + $0x70] sm:$0xff]
      %v1116 = vld [vmem:[%s6 + $0x78] sm:$0xff]
      %v1117 = vld [vmem:[%s6 + $0x80] sm:$0xff]
      %v1118 = vld [vmem:[%s6 + $0x88] sm:$0xff]
      %v1119 = vld [vmem:[%s6 + $0x90] sm:$0xff]
      %v1120 = vld [vmem:[%s6 + $0x98] sm:$0xff]
      %v1121 = vld [vmem:[%s6 + $0xa0] sm:$0xff]
      %v1122 = vld [vmem:[%s6 + $0xa8] sm:$0xff]
      %v1123 = vld [vmem:[%s6 + $0xb0] sm:$0xff]
      %v1124 = vld [vmem:[%s6 + $0xb8] sm:$0xff]
      %v1125 = vld [vmem:[%s6 + $0xc0] sm:$0xff]
      %v1126 = vld [vmem:[%s6 + $0xc8] sm:$0xff]
      %v1127 = vld [vmem:[%s6 + $0xd0] sm:$0xff]
      %v1128 = vld [vmem:[%s6 + $0xd8] sm:$0xff]
      %v1129 = vld [vmem:[%s6 + $0xe0] sm:$0xff]
      %v1130 = vld [vmem:[%s6 + $0xe8] sm:$0xff]
      %v1131 = vld [vmem:[%s6 + $0xf0] sm:$0xff]
      %v1132 = vld [vmem:[%s6 + $0xf8] sm:$0xff]
      %v1133 = vld [vmem:[%s7] sm:$0xff]
      %v1166 = vunpack.c.l.b16 %v1101
      %v1167 = vunpack.c.h.b16 %v1101
      %v1168 = vunpack.c.l.b16 %v1102
      %v1169 = vunpack.c.h.b16 %v1102
      %v1170 = vunpack.c.l.b16 %v1103
      %v1171 = vunpack.c.h.b16 %v1103
      %v1172 = vunpack.c.l.b16 %v1104
      %v1173 = vunpack.c.h.b16 %v1104
      %v1174 = vunpack.c.l.b16 %v1105
      %v1175 = vunpack.c.h.b16 %v1105
      %v1176 = vunpack.c.l.b16 %v1106
      %v1177 = vunpack.c.h.b16 %v1106
      %v1178 = vunpack.c.l.b16 %v1107
      %v1179 = vunpack.c.h.b16 %v1107
      %v1180 = vunpack.c.l.b16 %v1108
      %v1181 = vunpack.c.h.b16 %v1108
      %v1182 = vunpack.c.l.b16 %v1109
      %v1183 = vunpack.c.h.b16 %v1109
      %v1184 = vunpack.c.l.b16 %v1110
      %v1185 = vunpack.c.h.b16 %v1110
      %v1186 = vunpack.c.l.b16 %v1111
      %v1187 = vunpack.c.h.b16 %v1111
      %v1188 = vunpack.c.l.b16 %v1112
      %v1189 = vunpack.c.h.b16 %v1112
      %v1190 = vunpack.c.l.b16 %v1113
      %v1191 = vunpack.c.h.b16 %v1113
      %v1192 = vunpack.c.l.b16 %v1114
      %v1193 = vunpack.c.h.b16 %v1114
      %v1194 = vunpack.c.l.b16 %v1115
      %v1195 = vunpack.c.h.b16 %v1115
      %v1196 = vunpack.c.l.b16 %v1116
      %v1197 = vunpack.c.h.b16 %v1116
      %v1198 = vunpack.c.l.b16 %v1117
      %v1199 = vunpack.c.h.b16 %v1117
      %v1200 = vunpack.c.l.b16 %v1118
      %v1201 = vunpack.c.h.b16 %v1118
      %v1202 = vunpack.c.l.b16 %v1119
      %v1203 = vunpack.c.h.b16 %v1119
      %v1204 = vunpack.c.l.b16 %v1120
      %v1205 = vunpack.c.h.b16 %v1120
      %v1206 = vunpack.c.l.b16 %v1121
      %v1207 = vunpack.c.h.b16 %v1121
      %v1208 = vunpack.c.l.b16 %v1122
      %v1209 = vunpack.c.h.b16 %v1122
      %v1210 = vunpack.c.l.b16 %v1123
      %v1211 = vunpack.c.h.b16 %v1123
      %v1212 = vunpack.c.l.b16 %v1124
      %v1213 = vunpack.c.h.b16 %v1124
      %v1214 = vunpack.c.l.b16 %v1125
      %v1215 = vunpack.c.h.b16 %v1125
      %v1216 = vunpack.c.l.b16 %v1126
      %v1217 = vunpack.c.h.b16 %v1126
      %v1218 = vunpack.c.l.b16 %v1127
      %v1219 = vunpack.c.h.b16 %v1127
      %v1220 = vunpack.c.l.b16 %v1128
      %v1221 = vunpack.c.h.b16 %v1128
      %v1222 = vunpack.c.l.b16 %v1129
      %v1223 = vunpack.c.h.b16 %v1129
      %v1224 = vunpack.c.l.b16 %v1130
      %v1225 = vunpack.c.h.b16 %v1130
      %v1226 = vunpack.c.l.b16 %v1131
      %v1227 = vunpack.c.h.b16 %v1131
      %v1228 = vunpack.c.l.b16 %v1132
      %v1229 = vunpack.c.h.b16 %v1132
      %v1230 = vpack.c.b16 %v1174, %v1166
      %v1231 = vpack.c.b16 %v1175, %v1167
      %v1232 = vpack.c.b16 %v1176, %v1168
      %v1233 = vpack.c.b16 %v1177, %v1169
      %v1234 = vpack.c.b16 %v1178, %v1170
      %v1235 = vpack.c.b16 %v1179, %v1171
      %v1236 = vpack.c.b16 %v1180, %v1172
      %v1237 = vpack.c.b16 %v1181, %v1173
      %v1238 = vpack.c.b16 %v1190, %v1182
      %v1239 = vpack.c.b16 %v1191, %v1183
      %v1240 = vpack.c.b16 %v1192, %v1184
      %v1241 = vpack.c.b16 %v1193, %v1185
      %v1242 = vpack.c.b16 %v1194, %v1186
      %v1243 = vpack.c.b16 %v1195, %v1187
      %v1244 = vpack.c.b16 %v1196, %v1188
      %v1245 = vpack.c.b16 %v1197, %v1189
      %v1246 = vpack.c.b16 %v1206, %v1198
      %v1247 = vpack.c.b16 %v1207, %v1199
      %v1248 = vpack.c.b16 %v1208, %v1200
      %v1249 = vpack.c.b16 %v1209, %v1201
      %v1250 = vpack.c.b16 %v1210, %v1202
      %v1251 = vpack.c.b16 %v1211, %v1203
      %v1252 = vpack.c.b16 %v1212, %v1204
      %v1253 = vpack.c.b16 %v1213, %v1205
      %v1254 = vpack.c.b16 %v1222, %v1214
      %v1255 = vpack.c.b16 %v1223, %v1215
      %v1256 = vpack.c.b16 %v1224, %v1216
      %v1257 = vpack.c.b16 %v1225, %v1217
      %v1258 = vpack.c.b16 %v1226, %v1218
      %v1259 = vpack.c.b16 %v1227, %v1219
      %v1260 = vpack.c.b16 %v1228, %v1220
      %v1261 = vpack.c.b16 %v1229, %v1221
      %v1295 = vlaneseq
      %v1296 = vshrl.u32 %v1295, 7
      %v1297 = vsub.s32 0, %v1296
      %v1298 = vrot.slane %v1133, %v1297
      %v1299 = vlaneseq
      %v1300 = vshrl.u32 %v1299, 7
      %v1301 = vsub.s32 1, %v1300
      %v1302 = vrot.slane %v1133, %v1301
      %v1303 = vlaneseq
      %v1304 = vshrl.u32 %v1303, 7
      %v1305 = vsub.s32 2, %v1304
      %v1306 = vrot.slane %v1133, %v1305
      %v1307 = vlaneseq
      %v1308 = vshrl.u32 %v1307, 7
      %v1309 = vsub.s32 3, %v1308
      %v1310 = vrot.slane %v1133, %v1309
      %v1311 = vlaneseq
      %v1312 = vshrl.u32 %v1311, 7
      %v1313 = vsub.s32 4, %v1312
      %v1314 = vrot.slane %v1133, %v1313
      %v1315 = vlaneseq
      %v1316 = vshrl.u32 %v1315, 7
      %v1317 = vsub.s32 5, %v1316
      %v1318 = vrot.slane %v1133, %v1317
      %v1319 = vlaneseq
      %v1320 = vshrl.u32 %v1319, 7
      %v1321 = vsub.s32 6, %v1320
      %v1322 = vrot.slane %v1133, %v1321
      %v1323 = vlaneseq
      %v1324 = vshrl.u32 %v1323, 7
      %v1325 = vsub.s32 7, %v1324
      %v1326 = vrot.slane %v1133, %v1325
      %v1336 = vsel %vm764, %v1100, 0
      %1338 = vmatprep.subr.bf16.mxu0 %v1231
      %1339 = vmatpush1.bf16.msra.mxu0 %v1230
      %1340 = vmatprep.subr.bf16.mxu0 %v1239
      %1341 = vmatpush1.bf16.msra.mxu0 %v1238
      %1342 = vmatprep.subr.bf16.mxu0 %v1247
      %1343 = vmatpush1.bf16.msra.mxu0 %v1246
      %1344 = vmatprep.subr.bf16.mxu0 %v1255
      %1345 = vmatpush1.bf16.msra.mxu0 %v1254
      %1346 = vmatprep.subr.bf16.mxu0 0
      %1347 = vmatpush1.bf16.msra.mxu0 0
      %1348 = vmatprep.subr.bf16.mxu0 0
      %1349 = vmatpush1.bf16.msra.mxu0 0
      %1350 = vmatprep.subr.bf16.mxu0 0
      %1351 = vmatpush1.bf16.msra.mxu0 0
      %1352 = vmatprep.subr.bf16.mxu0 0
      %1353 = vmatpush1.bf16.msra.mxu0 0
      %1354 = vmatprep.subr.bf16.mxu0 0
      %1355 = vmatpush1.bf16.msra.mxu0 0
      %1356 = vmatprep.subr.bf16.mxu0 0
      %1357 = vmatpush1.bf16.msra.mxu0 0
      %1358 = vmatprep.subr.bf16.mxu0 0
      %1359 = vmatpush1.bf16.msra.mxu0 0
      %1360 = vmatprep.subr.bf16.mxu0 0
      %1361 = vmatpush1.bf16.msra.mxu0 0
      %1362 = vmatprep.subr.bf16.mxu0 0
      %1363 = vmatpush1.bf16.msra.mxu0 0
      %1364 = vmatprep.subr.bf16.mxu0 0
      %1365 = vmatpush1.bf16.msra.mxu0 0
      %1366 = vmatprep.subr.bf16.mxu0 0
      %1367 = vmatpush1.bf16.msra.mxu0 0
      %1368 = vmatprep.subr.bf16.mxu0 0
      %1369 = vmatpush1.bf16.msra.mxu0 0
      %1370 = vmatprep.mubr.bf16.mxu0 0
      %1371 = vmatmul.mubr.bf16.gmra.mrb[0].mxu0 %v1336
      %v1372 = vpop.f32.mrb[0].mxu0
      %v1373 = vadd.f32 %v1298, %v1372
      %v1374 = vpop.f32.mrb[0].mxu0
      %v1375 = vadd.f32 %v1302, %v1374
      %v1376 = vpop.f32.mrb[0].mxu0
      %v1377 = vpop.f32.mrb[0].mxu0
      %1378 = vdwg.mxu0
      %1379 = vmatprep.subr.bf16.mxu0 %v1233
      %1380 = vmatpush1.bf16.msra.mxu0 %v1232
      %1381 = vmatprep.subr.bf16.mxu0 %v1241
      %1382 = vmatpush1.bf16.msra.mxu0 %v1240
      %1383 = vmatprep.subr.bf16.mxu0 %v1249
      %1384 = vmatpush1.bf16.msra.mxu0 %v1248
      %1385 = vmatprep.subr.bf16.mxu0 %v1257
      %1386 = vmatpush1.bf16.msra.mxu0 %v1256
      %1387 = vmatprep.subr.bf16.mxu0 0
      %1388 = vmatpush1.bf16.msra.mxu0 0
      %1389 = vmatprep.subr.bf16.mxu0 0
      %1390 = vmatpush1.bf16.msra.mxu0 0
      %1391 = vmatprep.subr.bf16.mxu0 0
      %1392 = vmatpush1.bf16.msra.mxu0 0
      %1393 = vmatprep.subr.bf16.mxu0 0
      %1394 = vmatpush1.bf16.msra.mxu0 0
      %1395 = vmatprep.subr.bf16.mxu0 0
      %1396 = vmatpush1.bf16.msra.mxu0 0
      %1397 = vmatprep.subr.bf16.mxu0 0
      %1398 = vmatpush1.bf16.msra.mxu0 0
      %1399 = vmatprep.subr.bf16.mxu0 0
      %1400 = vmatpush1.bf16.msra.mxu0 0
      %1401 = vmatprep.subr.bf16.mxu0 0
      %1402 = vmatpush1.bf16.msra.mxu0 0
      %1403 = vmatprep.subr.bf16.mxu0 0
      %1404 = vmatpush1.bf16.msra.mxu0 0
      %1405 = vmatprep.subr.bf16.mxu0 0
      %1406 = vmatpush1.bf16.msra.mxu0 0
      %1407 = vmatprep.subr.bf16.mxu0 0
      %1408 = vmatpush1.bf16.msra.mxu0 0
      %1409 = vmatprep.subr.bf16.mxu0 0
      %1410 = vmatpush1.bf16.msra.mxu0 0
      %1411 = vmatprep.mubr.bf16.mxu0 0
      %1412 = vmatmul.mubr.bf16.gmra.mrb[0].mxu0 %v1336
      %v1413 = vpop.f32.mrb[0].mxu0
      %v1414 = vadd.f32 %v1306, %v1413
      %v1415 = vpop.f32.mrb[0].mxu0
      %v1416 = vadd.f32 %v1310, %v1415
      %v1417 = vpop.f32.mrb[0].mxu0
      %v1418 = vpop.f32.mrb[0].mxu0
      %1419 = vdwg.mxu0
      %1420 = vmatprep.subr.bf16.mxu0 %v1235
      %1421 = vmatpush1.bf16.msra.mxu0 %v1234
      %1422 = vmatprep.subr.bf16.mxu0 %v1243
      %1423 = vmatpush1.bf16.msra.mxu0 %v1242
      %1424 = vmatprep.subr.bf16.mxu0 %v1251
      %1425 = vmatpush1.bf16.msra.mxu0 %v1250
      %1426 = vmatprep.subr.bf16.mxu0 %v1259
      %1427 = vmatpush1.bf16.msra.mxu0 %v1258
      %1428 = vmatprep.subr.bf16.mxu0 0
      %1429 = vmatpush1.bf16.msra.mxu0 0
      %1430 = vmatprep.subr.bf16.mxu0 0
      %1431 = vmatpush1.bf16.msra.mxu0 0
      %1432 = vmatprep.subr.bf16.mxu0 0
      %1433 = vmatpush1.bf16.msra.mxu0 0
      %1434 = vmatprep.subr.bf16.mxu0 0
      %1435 = vmatpush1.bf16.msra.mxu0 0
      %1436 = vmatprep.subr.bf16.mxu0 0
      %1437 = vmatpush1.bf16.msra.mxu0 0
      %1438 = vmatprep.subr.bf16.mxu0 0
      %1439 = vmatpush1.bf16.msra.mxu0 0
      %1440 = vmatprep.subr.bf16.mxu0 0
      %1441 = vmatpush1.bf16.msra.mxu0 0
      %1442 = vmatprep.subr.bf16.mxu0 0
      %1443 = vmatpush1.bf16.msra.mxu0 0
      %1444 = vmatprep.subr.bf16.mxu0 0
      %1445 = vmatpush1.bf16.msra.mxu0 0
      %1446 = vmatprep.subr.bf16.mxu0 0
      %1447 = vmatpush1.bf16.msra.mxu0 0
      %1448 = vmatprep.subr.bf16.mxu0 0
      %1449 = vmatpush1.bf16.msra.mxu0 0
      %1450 = vmatprep.subr.bf16.mxu0 0
      %1451 = vmatpush1.bf16.msra.mxu0 0
      %1452 = vmatprep.mubr.bf16.mxu0 0
      %1453 = vmatmul.mubr.bf16.gmra.mrb[0].mxu0 %v1336
      %v1454 = vpop.f32.mrb[0].mxu0
      %v1455 = vadd.f32 %v1314, %v1454
      %v1456 = vpop.f32.mrb[0].mxu0
      %v1457 = vadd.f32 %v1318, %v1456
      %v1458 = vpop.f32.mrb[0].mxu0
      %v1459 = vpop.f32.mrb[0].mxu0
      %1460 = vdwg.mxu0
      %1461 = vmatprep.subr.bf16.mxu0 %v1237
      %1462 = vmatpush1.bf16.msra.mxu0 %v1236
      %1463 = vmatprep.subr.bf16.mxu0 %v1245
      %1464 = vmatpush1.bf16.msra.mxu0 %v1244
      %1465 = vmatprep.subr.bf16.mxu0 %v1253
      %1466 = vmatpush1.bf16.msra.mxu0 %v1252
      %1467 = vmatprep.subr.bf16.mxu0 %v1261
      %1468 = vmatpush1.bf16.msra.mxu0 %v1260
      %1469 = vmatprep.subr.bf16.mxu0 0
      %1470 = vmatpush1.bf16.msra.mxu0 0
      %1471 = vmatprep.subr.bf16.mxu0 0
      %1472 = vmatpush1.bf16.msra.mxu0 0
      %1473 = vmatprep.subr.bf16.mxu0 0
      %1474 = vmatpush1.bf16.msra.mxu0 0
      %1475 = vmatprep.subr.bf16.mxu0 0
      %1476 = vmatpush1.bf16.msra.mxu0 0
      %1477 = vmatprep.subr.bf16.mxu0 0
      %1478 = vmatpush1.bf16.msra.mxu0 0
      %1479 = vmatprep.subr.bf16.mxu0 0
      %1480 = vmatpush1.bf16.msra.mxu0 0
      %1481 = vmatprep.subr.bf16.mxu0 0
      %1482 = vmatpush1.bf16.msra.mxu0 0
      %1483 = vmatprep.subr.bf16.mxu0 0
      %1484 = vmatpush1.bf16.msra.mxu0 0
      %1485 = vmatprep.subr.bf16.mxu0 0
      %1486 = vmatpush1.bf16.msra.mxu0 0
      %1487 = vmatprep.subr.bf16.mxu0 0
      %1488 = vmatpush1.bf16.msra.mxu0 0
      %1489 = vmatprep.subr.bf16.mxu0 0
      %1490 = vmatpush1.bf16.msra.mxu0 0
      %1491 = vmatprep.subr.bf16.mxu0 0
      %1492 = vmatpush1.bf16.msra.mxu0 0
      %1493 = vmatprep.mubr.bf16.mxu0 0
      %1494 = vmatmul.mubr.bf16.gmra.mrb[0].mxu0 %v1336
      %v1495 = vpop.f32.mrb[0].mxu0
      %v1496 = vadd.f32 %v1322, %v1495
      %v1497 = vpop.f32.mrb[0].mxu0
      %v1498 = vadd.f32 %v1326, %v1497
      %v1499 = vpop.f32.mrb[0].mxu0
      %v1500 = vpop.f32.mrb[0].mxu0
      %1501 = vdwg.mxu0
      %v1502 = vpack.c.bf16 %v1373, %v1373
      %v1503 = vpack.c.bf16 %v1375, %v1375
      %v1504 = vpack.c.bf16 %v1414, %v1414
      %v1505 = vpack.c.bf16 %v1416, %v1416
      %v1506 = vpack.c.bf16 %v1455, %v1455
      %v1507 = vpack.c.bf16 %v1457, %v1457
      %v1508 = vpack.c.bf16 %v1496, %v1496
      %v1509 = vpack.c.bf16 %v1498, %v1498
      %v1510 = vld [vmem:[%s8] sm:$0xf]
      %v1511 = vld [vmem:[%s8 + $0x4] sm:$0xf]
      %v1512 = vld [vmem:[%s8 + $0x8] sm:$0xf]
      %v1513 = vld [vmem:[%s8 + $0xc] sm:$0xf]
      %v1514 = vld [vmem:[%s8 + $0x10] sm:$0xf]
      %v1515 = vld [vmem:[%s8 + $0x14] sm:$0xf]
      %v1516 = vld [vmem:[%s8 + $0x18] sm:$0xf]
      %v1517 = vld [vmem:[%s8 + $0x1c] sm:$0xf]
      %v1518 = vld [vmem:[%s8 + $0x20] sm:$0xf]
      %v1519 = vld [vmem:[%s8 + $0x24] sm:$0xf]
      %v1520 = vld [vmem:[%s8 + $0x28] sm:$0xf]
      %v1521 = vld [vmem:[%s8 + $0x2c] sm:$0xf]
      %v1522 = vld [vmem:[%s8 + $0x30] sm:$0xf]
      %v1523 = vld [vmem:[%s8 + $0x34] sm:$0xf]
      %v1524 = vld [vmem:[%s8 + $0x38] sm:$0xf]
      %v1525 = vld [vmem:[%s8 + $0x3c] sm:$0xf]
      %v1526 = vld [vmem:[%s8 + $0x40] sm:$0xf]
      %v1527 = vld [vmem:[%s8 + $0x44] sm:$0xf]
      %v1528 = vld [vmem:[%s8 + $0x48] sm:$0xf]
      %v1529 = vld [vmem:[%s8 + $0x4c] sm:$0xf]
      %v1530 = vld [vmem:[%s8 + $0x50] sm:$0xf]
      %v1531 = vld [vmem:[%s8 + $0x54] sm:$0xf]
      %v1532 = vld [vmem:[%s8 + $0x58] sm:$0xf]
      %v1533 = vld [vmem:[%s8 + $0x5c] sm:$0xf]
      %v1534 = vld [vmem:[%s8 + $0x60] sm:$0xf]
      %v1535 = vld [vmem:[%s8 + $0x64] sm:$0xf]
      %v1536 = vld [vmem:[%s8 + $0x68] sm:$0xf]
      %v1537 = vld [vmem:[%s8 + $0x6c] sm:$0xf]
      %v1538 = vld [vmem:[%s8 + $0x70] sm:$0xf]
      %v1539 = vld [vmem:[%s8 + $0x74] sm:$0xf]
      %v1540 = vld [vmem:[%s8 + $0x78] sm:$0xf]
      %v1541 = vld [vmem:[%s8 + $0x7c] sm:$0xf]
      %v1542 = vld [vmem:[%s8 + $0x80] sm:$0xf]
      %v1543 = vld [vmem:[%s8 + $0x84] sm:$0xf]
      %v1544 = vld [vmem:[%s8 + $0x88] sm:$0xf]
      %v1545 = vld [vmem:[%s8 + $0x8c] sm:$0xf]
      %v1546 = vld [vmem:[%s8 + $0x90] sm:$0xf]
      %v1547 = vld [vmem:[%s8 + $0x94] sm:$0xf]
      %v1548 = vld [vmem:[%s8 + $0x98] sm:$0xf]
      %v1549 = vld [vmem:[%s8 + $0x9c] sm:$0xf]
      %v1550 = vld [vmem:[%s8 + $0xa0] sm:$0xf]
      %v1551 = vld [vmem:[%s8 + $0xa4] sm:$0xf]
      %v1552 = vld [vmem:[%s8 + $0xa8] sm:$0xf]
      %v1553 = vld [vmem:[%s8 + $0xac] sm:$0xf]
      %v1554 = vld [vmem:[%s8 + $0xb0] sm:$0xf]
      %v1555 = vld [vmem:[%s8 + $0xb4] sm:$0xf]
      %v1556 = vld [vmem:[%s8 + $0xb8] sm:$0xf]
      %v1557 = vld [vmem:[%s8 + $0xbc] sm:$0xf]
      %v1558 = vld [vmem:[%s8 + $0xc0] sm:$0xf]
      %v1559 = vld [vmem:[%s8 + $0xc4] sm:$0xf]
      %v1560 = vld [vmem:[%s8 + $0xc8] sm:$0xf]
      %v1561 = vld [vmem:[%s8 + $0xcc] sm:$0xf]
      %v1562 = vld [vmem:[%s8 + $0xd0] sm:$0xf]
      %v1563 = vld [vmem:[%s8 + $0xd4] sm:$0xf]
      %v1564 = vld [vmem:[%s8 + $0xd8] sm:$0xf]
      %v1565 = vld [vmem:[%s8 + $0xdc] sm:$0xf]
      %v1566 = vld [vmem:[%s8 + $0xe0] sm:$0xf]
      %v1567 = vld [vmem:[%s8 + $0xe4] sm:$0xf]
      %v1568 = vld [vmem:[%s8 + $0xe8] sm:$0xf]
      %v1569 = vld [vmem:[%s8 + $0xec] sm:$0xf]
      %v1570 = vld [vmem:[%s8 + $0xf0] sm:$0xf]
      %v1571 = vld [vmem:[%s8 + $0xf4] sm:$0xf]
      %v1572 = vld [vmem:[%s8 + $0xf8] sm:$0xf]
      %v1573 = vld [vmem:[%s8 + $0xfc] sm:$0xf]
      %v1574 = vld [vmem:[%s8 + $0x100] sm:$0xf]
      %v1575 = vld [vmem:[%s8 + $0x104] sm:$0xf]
      %v1576 = vld [vmem:[%s8 + $0x108] sm:$0xf]
      %v1577 = vld [vmem:[%s8 + $0x10c] sm:$0xf]
      %v1578 = vld [vmem:[%s8 + $0x110] sm:$0xf]
      %v1579 = vld [vmem:[%s8 + $0x114] sm:$0xf]
      %v1580 = vld [vmem:[%s8 + $0x118] sm:$0xf]
      %v1581 = vld [vmem:[%s8 + $0x11c] sm:$0xf]
      %v1582 = vld [vmem:[%s8 + $0x120] sm:$0xf]
      %v1583 = vld [vmem:[%s8 + $0x124] sm:$0xf]
      %v1584 = vld [vmem:[%s8 + $0x128] sm:$0xf]
      %v1585 = vld [vmem:[%s8 + $0x12c] sm:$0xf]
      %v1586 = vld [vmem:[%s8 + $0x130] sm:$0xf]
      %v1587 = vld [vmem:[%s8 + $0x134] sm:$0xf]
      %v1588 = vld [vmem:[%s8 + $0x138] sm:$0xf]
      %v1589 = vld [vmem:[%s8 + $0x13c] sm:$0xf]
      %v1590 = vld [vmem:[%s8 + $0x140] sm:$0xf]
      %v1591 = vld [vmem:[%s8 + $0x144] sm:$0xf]
      %v1592 = vld [vmem:[%s8 + $0x148] sm:$0xf]
      %v1593 = vld [vmem:[%s8 + $0x14c] sm:$0xf]
      %v1594 = vld [vmem:[%s8 + $0x150] sm:$0xf]
      %v1595 = vld [vmem:[%s8 + $0x154] sm:$0xf]
      %v1596 = vld [vmem:[%s8 + $0x158] sm:$0xf]
      %v1597 = vld [vmem:[%s8 + $0x15c] sm:$0xf]
      %v1598 = vld [vmem:[%s8 + $0x160] sm:$0xf]
      %v1599 = vld [vmem:[%s8 + $0x164] sm:$0xf]
      %v1600 = vld [vmem:[%s8 + $0x168] sm:$0xf]
      %v1601 = vld [vmem:[%s8 + $0x16c] sm:$0xf]
      %v1602 = vld [vmem:[%s8 + $0x170] sm:$0xf]
      %v1603 = vld [vmem:[%s8 + $0x174] sm:$0xf]
      %v1604 = vld [vmem:[%s8 + $0x178] sm:$0xf]
      %v1605 = vld [vmem:[%s8 + $0x17c] sm:$0xf]
      %v1606 = vld [vmem:[%s8 + $0x180] sm:$0xf]
      %v1607 = vld [vmem:[%s8 + $0x184] sm:$0xf]
      %v1608 = vld [vmem:[%s8 + $0x188] sm:$0xf]
      %v1609 = vld [vmem:[%s8 + $0x18c] sm:$0xf]
      %v1610 = vld [vmem:[%s8 + $0x190] sm:$0xf]
      %v1611 = vld [vmem:[%s8 + $0x194] sm:$0xf]
      %v1612 = vld [vmem:[%s8 + $0x198] sm:$0xf]
      %v1613 = vld [vmem:[%s8 + $0x19c] sm:$0xf]
      %v1614 = vld [vmem:[%s8 + $0x1a0] sm:$0xf]
      %v1615 = vld [vmem:[%s8 + $0x1a4] sm:$0xf]
      %v1616 = vld [vmem:[%s8 + $0x1a8] sm:$0xf]
      %v1617 = vld [vmem:[%s8 + $0x1ac] sm:$0xf]
      %v1618 = vld [vmem:[%s8 + $0x1b0] sm:$0xf]
      %v1619 = vld [vmem:[%s8 + $0x1b4] sm:$0xf]
      %v1620 = vld [vmem:[%s8 + $0x1b8] sm:$0xf]
      %v1621 = vld [vmem:[%s8 + $0x1bc] sm:$0xf]
      %v1622 = vld [vmem:[%s8 + $0x1c0] sm:$0xf]
      %v1623 = vld [vmem:[%s8 + $0x1c4] sm:$0xf]
      %v1624 = vld [vmem:[%s8 + $0x1c8] sm:$0xf]
      %v1625 = vld [vmem:[%s8 + $0x1cc] sm:$0xf]
      %v1626 = vld [vmem:[%s8 + $0x1d0] sm:$0xf]
      %v1627 = vld [vmem:[%s8 + $0x1d4] sm:$0xf]
      %v1628 = vld [vmem:[%s8 + $0x1d8] sm:$0xf]
      %v1629 = vld [vmem:[%s8 + $0x1dc] sm:$0xf]
      %v1630 = vld [vmem:[%s8 + $0x1e0] sm:$0xf]
      %v1631 = vld [vmem:[%s8 + $0x1e4] sm:$0xf]
      %v1632 = vld [vmem:[%s8 + $0x1e8] sm:$0xf]
      %v1633 = vld [vmem:[%s8 + $0x1ec] sm:$0xf]
      %v1634 = vld [vmem:[%s8 + $0x1f0] sm:$0xf]
      %v1635 = vld [vmem:[%s8 + $0x1f4] sm:$0xf]
      %v1636 = vld [vmem:[%s8 + $0x1f8] sm:$0xf]
      %v1637 = vld [vmem:[%s8 + $0x1fc] sm:$0xf]
      %v1638 = vld [vmem:[%s9] sm:$0x1]
      %v1767 = vunpack.c.l.b16 %v1510
      %v1768 = vunpack.c.l.b16 %v1511
      %v1769 = vunpack.c.l.b16 %v1512
      %v1770 = vunpack.c.l.b16 %v1513
      %v1771 = vunpack.c.l.b16 %v1514
      %v1772 = vunpack.c.l.b16 %v1515
      %v1773 = vunpack.c.l.b16 %v1516
      %v1774 = vunpack.c.l.b16 %v1517
      %v1775 = vunpack.c.l.b16 %v1518
      %v1776 = vunpack.c.l.b16 %v1519
      %v1777 = vunpack.c.l.b16 %v1520
      %v1778 = vunpack.c.l.b16 %v1521
      %v1779 = vunpack.c.l.b16 %v1522
      %v1780 = vunpack.c.l.b16 %v1523
      %v1781 = vunpack.c.l.b16 %v1524
      %v1782 = vunpack.c.l.b16 %v1525
      %v1783 = vunpack.c.l.b16 %v1526
      %v1784 = vunpack.c.l.b16 %v1527
      %v1785 = vunpack.c.l.b16 %v1528
      %v1786 = vunpack.c.l.b16 %v1529
      %v1787 = vunpack.c.l.b16 %v1530
      %v1788 = vunpack.c.l.b16 %v1531
      %v1789 = vunpack.c.l.b16 %v1532
      %v1790 = vunpack.c.l.b16 %v1533
      %v1791 = vunpack.c.l.b16 %v1534
      %v1792 = vunpack.c.l.b16 %v1535
      %v1793 = vunpack.c.l.b16 %v1536
      %v1794 = vunpack.c.l.b16 %v1537
      %v1795 = vunpack.c.l.b16 %v1538
      %v1796 = vunpack.c.l.b16 %v1539
      %v1797 = vunpack.c.l.b16 %v1540
      %v1798 = vunpack.c.l.b16 %v1541
      %v1799 = vunpack.c.l.b16 %v1542
      %v1800 = vunpack.c.l.b16 %v1543
      %v1801 = vunpack.c.l.b16 %v1544
      %v1802 = vunpack.c.l.b16 %v1545
      %v1803 = vunpack.c.l.b16 %v1546
      %v1804 = vunpack.c.l.b16 %v1547
      %v1805 = vunpack.c.l.b16 %v1548
      %v1806 = vunpack.c.l.b16 %v1549
      %v1807 = vunpack.c.l.b16 %v1550
      %v1808 = vunpack.c.l.b16 %v1551
      %v1809 = vunpack.c.l.b16 %v1552
      %v1810 = vunpack.c.l.b16 %v1553
      %v1811 = vunpack.c.l.b16 %v1554
      %v1812 = vunpack.c.l.b16 %v1555
      %v1813 = vunpack.c.l.b16 %v1556
      %v1814 = vunpack.c.l.b16 %v1557
      %v1815 = vunpack.c.l.b16 %v1558
      %v1816 = vunpack.c.l.b16 %v1559
      %v1817 = vunpack.c.l.b16 %v1560
      %v1818 = vunpack.c.l.b16 %v1561
      %v1819 = vunpack.c.l.b16 %v1562
      %v1820 = vunpack.c.l.b16 %v1563
      %v1821 = vunpack.c.l.b16 %v1564
      %v1822 = vunpack.c.l.b16 %v1565
      %v1823 = vunpack.c.l.b16 %v1566
      %v1824 = vunpack.c.l.b16 %v1567
      %v1825 = vunpack.c.l.b16 %v1568
      %v1826 = vunpack.c.l.b16 %v1569
      %v1827 = vunpack.c.l.b16 %v1570
      %v1828 = vunpack.c.l.b16 %v1571
      %v1829 = vunpack.c.l.b16 %v1572
      %v1830 = vunpack.c.l.b16 %v1573
      %v1831 = vunpack.c.l.b16 %v1574
      %v1832 = vunpack.c.l.b16 %v1575
      %v1833 = vunpack.c.l.b16 %v1576
      %v1834 = vunpack.c.l.b16 %v1577
      %v1835 = vunpack.c.l.b16 %v1578
      %v1836 = vunpack.c.l.b16 %v1579
      %v1837 = vunpack.c.l.b16 %v1580
      %v1838 = vunpack.c.l.b16 %v1581
      %v1839 = vunpack.c.l.b16 %v1582
      %v1840 = vunpack.c.l.b16 %v1583
      %v1841 = vunpack.c.l.b16 %v1584
      %v1842 = vunpack.c.l.b16 %v1585
      %v1843 = vunpack.c.l.b16 %v1586
      %v1844 = vunpack.c.l.b16 %v1587
      %v1845 = vunpack.c.l.b16 %v1588
      %v1846 = vunpack.c.l.b16 %v1589
      %v1847 = vunpack.c.l.b16 %v1590
      %v1848 = vunpack.c.l.b16 %v1591
      %v1849 = vunpack.c.l.b16 %v1592
      %v1850 = vunpack.c.l.b16 %v1593
      %v1851 = vunpack.c.l.b16 %v1594
      %v1852 = vunpack.c.l.b16 %v1595
      %v1853 = vunpack.c.l.b16 %v1596
      %v1854 = vunpack.c.l.b16 %v1597
      %v1855 = vunpack.c.l.b16 %v1598
      %v1856 = vunpack.c.l.b16 %v1599
      %v1857 = vunpack.c.l.b16 %v1600
      %v1858 = vunpack.c.l.b16 %v1601
      %v1859 = vunpack.c.l.b16 %v1602
      %v1860 = vunpack.c.l.b16 %v1603
      %v1861 = vunpack.c.l.b16 %v1604
      %v1862 = vunpack.c.l.b16 %v1605
      %v1863 = vunpack.c.l.b16 %v1606
      %v1864 = vunpack.c.l.b16 %v1607
      %v1865 = vunpack.c.l.b16 %v1608
      %v1866 = vunpack.c.l.b16 %v1609
      %v1867 = vunpack.c.l.b16 %v1610
      %v1868 = vunpack.c.l.b16 %v1611
      %v1869 = vunpack.c.l.b16 %v1612
      %v1870 = vunpack.c.l.b16 %v1613
      %v1871 = vunpack.c.l.b16 %v1614
      %v1872 = vunpack.c.l.b16 %v1615
      %v1873 = vunpack.c.l.b16 %v1616
      %v1874 = vunpack.c.l.b16 %v1617
      %v1875 = vunpack.c.l.b16 %v1618
      %v1876 = vunpack.c.l.b16 %v1619
      %v1877 = vunpack.c.l.b16 %v1620
      %v1878 = vunpack.c.l.b16 %v1621
      %v1879 = vunpack.c.l.b16 %v1622
      %v1880 = vunpack.c.l.b16 %v1623
      %v1881 = vunpack.c.l.b16 %v1624
      %v1882 = vunpack.c.l.b16 %v1625
      %v1883 = vunpack.c.l.b16 %v1626
      %v1884 = vunpack.c.l.b16 %v1627
      %v1885 = vunpack.c.l.b16 %v1628
      %v1886 = vunpack.c.l.b16 %v1629
      %v1887 = vunpack.c.l.b16 %v1630
      %v1888 = vunpack.c.l.b16 %v1631
      %v1889 = vunpack.c.l.b16 %v1632
      %v1890 = vunpack.c.l.b16 %v1633
      %v1891 = vunpack.c.l.b16 %v1634
      %v1892 = vunpack.c.l.b16 %v1635
      %v1893 = vunpack.c.l.b16 %v1636
      %v1894 = vunpack.c.l.b16 %v1637
      %v1895 = vpack.c.b16 %v1768, %v1767
      %v1896 = vpack.c.b16 %v1770, %v1769
      %v1897 = vpack.c.b16 %v1772, %v1771
      %v1898 = vpack.c.b16 %v1774, %v1773
      %v1899 = vpack.c.b16 %v1776, %v1775
      %v1900 = vpack.c.b16 %v1778, %v1777
      %v1901 = vpack.c.b16 %v1780, %v1779
      %v1902 = vpack.c.b16 %v1782, %v1781
      %v1903 = vpack.c.b16 %v1784, %v1783
      %v1904 = vpack.c.b16 %v1786, %v1785
      %v1905 = vpack.c.b16 %v1788, %v1787
      %v1906 = vpack.c.b16 %v1790, %v1789
      %v1907 = vpack.c.b16 %v1792, %v1791
      %v1908 = vpack.c.b16 %v1794, %v1793
      %v1909 = vpack.c.b16 %v1796, %v1795
      %v1910 = vpack.c.b16 %v1798, %v1797
      %v1911 = vpack.c.b16 %v1800, %v1799
      %v1912 = vpack.c.b16 %v1802, %v1801
      %v1913 = vpack.c.b16 %v1804, %v1803
      %v1914 = vpack.c.b16 %v1806, %v1805
      %v1915 = vpack.c.b16 %v1808, %v1807
      %v1916 = vpack.c.b16 %v1810, %v1809
      %v1917 = vpack.c.b16 %v1812, %v1811
      %v1918 = vpack.c.b16 %v1814, %v1813
      %v1919 = vpack.c.b16 %v1816, %v1815
      %v1920 = vpack.c.b16 %v1818, %v1817
      %v1921 = vpack.c.b16 %v1820, %v1819
      %v1922 = vpack.c.b16 %v1822, %v1821
      %v1923 = vpack.c.b16 %v1824, %v1823
      %v1924 = vpack.c.b16 %v1826, %v1825
      %v1925 = vpack.c.b16 %v1828, %v1827
      %v1926 = vpack.c.b16 %v1830, %v1829
      %v1927 = vpack.c.b16 %v1832, %v1831
      %v1928 = vpack.c.b16 %v1834, %v1833
      %v1929 = vpack.c.b16 %v1836, %v1835
      %v1930 = vpack.c.b16 %v1838, %v1837
      %v1931 = vpack.c.b16 %v1840, %v1839
      %v1932 = vpack.c.b16 %v1842, %v1841
      %v1933 = vpack.c.b16 %v1844, %v1843
      %v1934 = vpack.c.b16 %v1846, %v1845
      %v1935 = vpack.c.b16 %v1848, %v1847
      %v1936 = vpack.c.b16 %v1850, %v1849
      %v1937 = vpack.c.b16 %v1852, %v1851
      %v1938 = vpack.c.b16 %v1854, %v1853
      %v1939 = vpack.c.b16 %v1856, %v1855
      %v1940 = vpack.c.b16 %v1858, %v1857
      %v1941 = vpack.c.b16 %v1860, %v1859
      %v1942 = vpack.c.b16 %v1862, %v1861
      %v1943 = vpack.c.b16 %v1864, %v1863
      %v1944 = vpack.c.b16 %v1866, %v1865
      %v1945 = vpack.c.b16 %v1868, %v1867
      %v1946 = vpack.c.b16 %v1870, %v1869
      %v1947 = vpack.c.b16 %v1872, %v1871
      %v1948 = vpack.c.b16 %v1874, %v1873
      %v1949 = vpack.c.b16 %v1876, %v1875
      %v1950 = vpack.c.b16 %v1878, %v1877
      %v1951 = vpack.c.b16 %v1880, %v1879
      %v1952 = vpack.c.b16 %v1882, %v1881
      %v1953 = vpack.c.b16 %v1884, %v1883
      %v1954 = vpack.c.b16 %v1886, %v1885
      %v1955 = vpack.c.b16 %v1888, %v1887
      %v1956 = vpack.c.b16 %v1890, %v1889
      %v1957 = vpack.c.b16 %v1892, %v1891
      %v1958 = vpack.c.b16 %v1894, %v1893
      %2023 = vmatprep.subr.bf16.mxu0 0
      %2024 = vmatpush1.bf16.msra.mxu0 %v1895
      %2025 = vmatprep.subr.bf16.mxu0 0
      %2026 = vmatpush1.bf16.msra.mxu0 %v1896
      %2027 = vmatprep.subr.bf16.mxu0 0
      %2028 = vmatpush1.bf16.msra.mxu0 %v1897
      %2029 = vmatprep.subr.bf16.mxu0 0
      %2030 = vmatpush1.bf16.msra.mxu0 %v1898
      %2031 = vmatprep.subr.bf16.mxu0 0
      %2032 = vmatpush1.bf16.msra.mxu0 %v1899
      %2033 = vmatprep.subr.bf16.mxu0 0
      %2034 = vmatpush1.bf16.msra.mxu0 %v1900
      %2035 = vmatprep.subr.bf16.mxu0 0
      %2036 = vmatpush1.bf16.msra.mxu0 %v1901
      %2037 = vmatprep.subr.bf16.mxu0 0
      %2038 = vmatpush1.bf16.msra.mxu0 %v1902
      %2039 = vmatprep.subr.bf16.mxu0 0
      %2040 = vmatpush1.bf16.msra.mxu0 %v1903
      %2041 = vmatprep.subr.bf16.mxu0 0
      %2042 = vmatpush1.bf16.msra.mxu0 %v1904
      %2043 = vmatprep.subr.bf16.mxu0 0
      %2044 = vmatpush1.bf16.msra.mxu0 %v1905
      %2045 = vmatprep.subr.bf16.mxu0 0
      %2046 = vmatpush1.bf16.msra.mxu0 %v1906
      %2047 = vmatprep.subr.bf16.mxu0 0
      %2048 = vmatpush1.bf16.msra.mxu0 %v1907
      %2049 = vmatprep.subr.bf16.mxu0 0
      %2050 = vmatpush1.bf16.msra.mxu0 %v1908
      %2051 = vmatprep.subr.bf16.mxu0 0
      %2052 = vmatpush1.bf16.msra.mxu0 %v1909
      %2053 = vmatprep.subr.bf16.mxu0 0
      %2054 = vmatpush1.bf16.msra.mxu0 %v1910
      %2055 = vmatprep.mubr.bf16.mxu0 %v1503
      %2056 = vmatmul.mubr.bf16.gmra.mrb[0].mxu0 %v1502
      %v2057 = vpop.f32.mrb[0].mxu0
      %v2058 = vadd.f32 %v1638, %v2057
      %v2059 = vpop.f32.mrb[0].mxu0
      %v2060 = vpop.f32.mrb[0].mxu0
      %v2061 = vpop.f32.mrb[0].mxu0
      %2062 = vdwg.mxu0
      %2063 = vmatprep.subr.bf16.mxu0 0
      %2064 = vmatpush1.bf16.msra.mxu0 %v1911
      %2065 = vmatprep.subr.bf16.mxu0 0
      %2066 = vmatpush1.bf16.msra.mxu0 %v1912
      %2067 = vmatprep.subr.bf16.mxu0 0
      %2068 = vmatpush1.bf16.msra.mxu0 %v1913
      %2069 = vmatprep.subr.bf16.mxu0 0
      %2070 = vmatpush1.bf16.msra.mxu0 %v1914
      %2071 = vmatprep.subr.bf16.mxu0 0
      %2072 = vmatpush1.bf16.msra.mxu0 %v1915
      %2073 = vmatprep.subr.bf16.mxu0 0
      %2074 = vmatpush1.bf16.msra.mxu0 %v1916
      %2075 = vmatprep.subr.bf16.mxu0 0
      %2076 = vmatpush1.bf16.msra.mxu0 %v1917
      %2077 = vmatprep.subr.bf16.mxu0 0
      %2078 = vmatpush1.bf16.msra.mxu0 %v1918
      %2079 = vmatprep.subr.bf16.mxu0 0
      %2080 = vmatpush1.bf16.msra.mxu0 %v1919
      %2081 = vmatprep.subr.bf16.mxu0 0
      %2082 = vmatpush1.bf16.msra.mxu0 %v1920
      %2083 = vmatprep.subr.bf16.mxu0 0
      %2084 = vmatpush1.bf16.msra.mxu0 %v1921
      %2085 = vmatprep.subr.bf16.mxu0 0
      %2086 = vmatpush1.bf16.msra.mxu0 %v1922
      %2087 = vmatprep.subr.bf16.mxu0 0
      %2088 = vmatpush1.bf16.msra.mxu0 %v1923
      %2089 = vmatprep.subr.bf16.mxu0 0
      %2090 = vmatpush1.bf16.msra.mxu0 %v1924
      %2091 = vmatprep.subr.bf16.mxu0 0
      %2092 = vmatpush1.bf16.msra.mxu0 %v1925
      %2093 = vmatprep.subr.bf16.mxu0 0
      %2094 = vmatpush1.bf16.msra.mxu0 %v1926
      %2095 = vmatprep.mubr.bf16.mxu0 %v1505
      %2096 = vmatmul.mubr.bf16.gmra.mrb[0].mxu0 %v1504
      %v2097 = vpop.f32.mrb[0].mxu0
      %v2098 = vadd.f32 %v2058, %v2097
      %v2099 = vpop.f32.mrb[0].mxu0
      %v2100 = vpop.f32.mrb[0].mxu0
      %v2101 = vpop.f32.mrb[0].mxu0
      %2102 = vdwg.mxu0
      %2103 = vmatprep.subr.bf16.mxu0 0
      %2104 = vmatpush1.bf16.msra.mxu0 %v1927
      %2105 = vmatprep.subr.bf16.mxu0 0
      %2106 = vmatpush1.bf16.msra.mxu0 %v1928
      %2107 = vmatprep.subr.bf16.mxu0 0
      %2108 = vmatpush1.bf16.msra.mxu0 %v1929
      %2109 = vmatprep.subr.bf16.mxu0 0
      %2110 = vmatpush1.bf16.msra.mxu0 %v1930
      %2111 = vmatprep.subr.bf16.mxu0 0
      %2112 = vmatpush1.bf16.msra.mxu0 %v1931
      %2113 = vmatprep.subr.bf16.mxu0 0
      %2114 = vmatpush1.bf16.msra.mxu0 %v1932
      %2115 = vmatprep.subr.bf16.mxu0 0
      %2116 = vmatpush1.bf16.msra.mxu0 %v1933
      %2117 = vmatprep.subr.bf16.mxu0 0
      %2118 = vmatpush1.bf16.msra.mxu0 %v1934
      %2119 = vmatprep.subr.bf16.mxu0 0
      %2120 = vmatpush1.bf16.msra.mxu0 %v1935
      %2121 = vmatprep.subr.bf16.mxu0 0
      %2122 = vmatpush1.bf16.msra.mxu0 %v1936
      %2123 = vmatprep.subr.bf16.mxu0 0
      %2124 = vmatpush1.bf16.msra.mxu0 %v1937
      %2125 = vmatprep.subr.bf16.mxu0 0
      %2126 = vmatpush1.bf16.msra.mxu0 %v1938
      %2127 = vmatprep.subr.bf16.mxu0 0
      %2128 = vmatpush1.bf16.msra.mxu0 %v1939
      %2129 = vmatprep.subr.bf16.mxu0 0
      %2130 = vmatpush1.bf16.msra.mxu0 %v1940
      %2131 = vmatprep.subr.bf16.mxu0 0
      %2132 = vmatpush1.bf16.msra.mxu0 %v1941
      %2133 = vmatprep.subr.bf16.mxu0 0
      %2134 = vmatpush1.bf16.msra.mxu0 %v1942
      %2135 = vmatprep.mubr.bf16.mxu0 %v1507
      %2136 = vmatmul.mubr.bf16.gmra.mrb[0].mxu0 %v1506
      %v2137 = vpop.f32.mrb[0].mxu0
      %v2138 = vadd.f32 %v2098, %v2137
      %v2139 = vpop.f32.mrb[0].mxu0
      %v2140 = vpop.f32.mrb[0].mxu0
      %v2141 = vpop.f32.mrb[0].mxu0
      %2142 = vdwg.mxu0
      %2143 = vmatprep.subr.bf16.mxu0 0
      %2144 = vmatpush1.bf16.msra.mxu0 %v1943
      %2145 = vmatprep.subr.bf16.mxu0 0
      %2146 = vmatpush1.bf16.msra.mxu0 %v1944
      %2147 = vmatprep.subr.bf16.mxu0 0
      %2148 = vmatpush1.bf16.msra.mxu0 %v1945
      %2149 = vmatprep.subr.bf16.mxu0 0
      %2150 = vmatpush1.bf16.msra.mxu0 %v1946
      %2151 = vmatprep.subr.bf16.mxu0 0
      %2152 = vmatpush1.bf16.msra.mxu0 %v1947
      %2153 = vmatprep.subr.bf16.mxu0 0
      %2154 = vmatpush1.bf16.msra.mxu0 %v1948
      %2155 = vmatprep.subr.bf16.mxu0 0
      %2156 = vmatpush1.bf16.msra.mxu0 %v1949
      %2157 = vmatprep.subr.bf16.mxu0 0
      %2158 = vmatpush1.bf16.msra.mxu0 %v1950
      %2159 = vmatprep.subr.bf16.mxu0 0
      %2160 = vmatpush1.bf16.msra.mxu0 %v1951
      %2161 = vmatprep.subr.bf16.mxu0 0
      %2162 = vmatpush1.bf16.msra.mxu0 %v1952
      %2163 = vmatprep.subr.bf16.mxu0 0
      %2164 = vmatpush1.bf16.msra.mxu0 %v1953
      %2165 = vmatprep.subr.bf16.mxu0 0
      %2166 = vmatpush1.bf16.msra.mxu0 %v1954
      %2167 = vmatprep.subr.bf16.mxu0 0
      %2168 = vmatpush1.bf16.msra.mxu0 %v1955
      %2169 = vmatprep.subr.bf16.mxu0 0
      %2170 = vmatpush1.bf16.msra.mxu0 %v1956
      %2171 = vmatprep.subr.bf16.mxu0 0
      %2172 = vmatpush1.bf16.msra.mxu0 %v1957
      %2173 = vmatprep.subr.bf16.mxu0 0
      %2174 = vmatpush1.bf16.msra.mxu0 %v1958
      %2175 = vmatprep.mubr.bf16.mxu0 %v1509
      %2176 = vmatmul.mubr.bf16.gmra.mrb[0].mxu0 %v1508
      %v2177 = vpop.f32.mrb[0].mxu0
      %v2178 = vadd.f32 %v2138, %v2177
      %v2179 = vpop.f32.mrb[0].mxu0
      %v2180 = vpop.f32.mrb[0].mxu0
      %v2181 = vpop.f32.mrb[0].mxu0
      %2182 = vdwg.mxu0
      %vm2183 = vcmp.ge.s32.totalorder %v849, 1
      %vm2184 = vcmp.lt.s32.totalorder %v849, 8
      %vm2185 = vmand %vm2183, %vm2184
      %v2186 = vsel %vm2185, %v2178, -1e+30
      %vm2187 = vcmask 1040384
      %v2188 = vsel %vm2187, %v2186, -inf
      %2189 = vmax.xlane.f32.xlu0 %v2188
      %v2190 = vpop.xlane.xlu0 %2189
      %v2191 = vsub.f32 %v2186, %v2190
      %v2192 = vmul.f32 %v2191, 1.442695
      %v2193 = vpow.pop %v2192
      %v2194 = vsel %vm2185, %v2193, 0.0
      %v2195 = vsel %vm2187, %v2194, 0.0
      %2196 = vadd.xlane.f32.xlu0 %v2195
      %v2197 = vpop.xlane.xlu0 %2196
      %v2198 = vlog2.pop %v2197
      %v2199 = vmul.f32 %v2198, 0.6931472
      %v2200 = vadd.f32 %v2190, %v2199
      %s2201 = sld [smem:[#allocation3 + %s30]]
      %s2202 = sadd.s32 %s2201, 1
      %v2203 = vstv %s2202
      %vm2204 = vcmp.eq.s32.totalorder %v849, %v2203
      %v2205 = vsel %vm2204, %v2178, 0.0
      %v2206 = vsel %vm2187, %v2205, 0.0
      %2207 = vadd.xlane.f32.xlu0 %v2206
      %v2208 = vpop.xlane.xlu0 %2207
      %v2209 = vsub.f32 %v2200, %v2208
      %vm2210 = vcmp.eq.s32.totalorder %v849, 8
      %v2211 = vsel %vm2210, %v2209, %v2178
      %v2212 = vlaneseq
      %v2213 = vshrl.u32 %v2212, 7
      %v2214 = vsub.s32 0, %v2213
      %v2215 = vrot.slane %v2211, %v2214
      %2216 = vst [vmem:[%s412] sm:$0xff] %v2215
      %p2217 = scmp.lt.s32.totalorder %s30, 2
      %s2218 = scalar_select %p2217, %s30, 2
      %s2219 = smul.addr %s2218, 4
      %s2220 = scalar_lea.vmem %s10, %s2219
      %p2221 = scmp.lt.s32.totalorder %s30, 2
      %s2222 = scalar_select %p2221, %s30, 2
      %s2223 = smul.addr %s2222, 4
      %s2224 = scalar_lea.vmem %s11, %s2223
      %p2225 = scmp.lt.s32.totalorder %s30, 2
      %s2226 = scalar_select %p2225, %s30, 2
      %s2227 = smul.addr %s2226, 8
      %s2228 = scalar_lea.vmem %s12, %s2227
      // Predicated region
      $region57: #{ac_crop_discriminator_forward.1} parent=55 // pred_check
        %p2229 = pneg %p242
      $region58: #{ac_crop_discriminator_forward.1} parent=55 // pred_check_branch
        %2231 = sbr.rel (%p2229) target = $region60
      $region59: #{ac_crop_discriminator_forward.1} parent=55 // pred_region
        _
      $region60: #{ac_crop_discriminator_forward.1} parent=55 // pred_fallthru
        _
      // Predicated region
      $region61: #{ac_crop_discriminator_forward.1} parent=55 // pred_check
        %p2232 = pneg %p268
      $region62: #{ac_crop_discriminator_forward.1} parent=55 // pred_check_branch
        %2234 = sbr.rel (%p2232) target = $region64
      $region63: #{ac_crop_discriminator_forward.1} parent=55 // pred_region
        _
      $region64: #{ac_crop_discriminator_forward.1} parent=55 // pred_fallthru
        _
      // Predicated region
      $region65: #{ac_crop_discriminator_forward.1} parent=55 // pred_check
        %p2235 = pneg %p294
      $region66: #{ac_crop_discriminator_forward.1} parent=55 // pred_check_branch
        %2237 = sbr.rel (%p2235) target = $region68
      $region67: #{ac_crop_discriminator_forward.1} parent=55 // pred_region
        _
      $region68: #{ac_crop_discriminator_forward.1} parent=55 // pred_fallthru
        _
    $region56: #{ac_crop_discriminator_forward.1} parent=5 // pred_fallthru
      _
    %p2238 = scmp.le.s32.totalorder 2, %s25
    // Predicated region
    $region69: #{ac_crop_discriminator_forward.1} parent=5 // pred_check
      %p2239 = pneg %p2238
    $region70: #{ac_crop_discriminator_forward.1} parent=5 // pred_check_branch
      %2241 = sbr.rel (%p2239) target = $region72
    $region71: #{ac_crop_discriminator_forward.1} parent=5 // pred_region
      %s2242 = ssub.s32 %s25, 2
      // Predicated region
      $region73: #{ac_crop_discriminator_forward.1} parent=71 // pred_check
        %p2243 = pneg %p248
      $region74: #{ac_crop_discriminator_forward.1} parent=71 // pred_check_branch
        %2245 = sbr.rel (%p2243) target = $region76
      $region75: #{ac_crop_discriminator_forward.1} parent=71 // pred_region
        %p2246 = scmp.lt.s32.totalorder %s31, 2
        %s2247 = scalar_select %p2246, %s31, 2
        %s2248 = smul.addr %s2247, 4
        %s2249 = scalar_lea.vmem %s10, %s2248
      $region76: #{ac_crop_discriminator_forward.1} parent=71 // pred_fallthru
        _
      // Predicated region
      $region77: #{ac_crop_discriminator_forward.1} parent=71 // pred_check
        %p2250 = pneg %p274
      $region78: #{ac_crop_discriminator_forward.1} parent=71 // pred_check_branch
        %2252 = sbr.rel (%p2250) target = $region80
      $region79: #{ac_crop_discriminator_forward.1} parent=71 // pred_region
        %p2253 = scmp.lt.s32.totalorder %s31, 2
        %s2254 = scalar_select %p2253, %s31, 2
        %s2255 = smul.addr %s2254, 4
        %s2256 = scalar_lea.vmem %s11, %s2255
      $region80: #{ac_crop_discriminator_forward.1} parent=71 // pred_fallthru
        _
      // Predicated region
      $region81: #{ac_crop_discriminator_forward.1} parent=71 // pred_check
        %p2257 = pneg %p300
      $region82: #{ac_crop_discriminator_forward.1} parent=71 // pred_check_branch
        %2259 = sbr.rel (%p2257) target = $region84
      $region83: #{ac_crop_discriminator_forward.1} parent=71 // pred_region
        %p2260 = scmp.lt.s32.totalorder %s31, 2
        %s2261 = scalar_select %p2260, %s31, 2
        %s2262 = smul.addr %s2261, 8
        %s2263 = scalar_lea.vmem %s12, %s2262
      $region84: #{ac_crop_discriminator_forward.1} parent=71 // pred_fallthru
        _
    $region72: #{ac_crop_discriminator_forward.1} parent=5 // pred_fallthru
      _
  $region6: #{ac_crop_discriminator_forward.1} parent=0 // loop_footer
    %s29 = sadd.s32 1, %s25
  $region7: #{ac_crop_discriminator_forward.1} parent=0 // loop_footer_branch
    %24 = sbr.rel target = $region3
  $region8: #{ac_crop_discriminator_forward.1} parent=0 // loop_exit
    _

</llo_original>
